<compile_context>
chip_gen: v7x
topology: tpu7x:2x2x1
jax: 0.10.0
libtpu: 0.0.40
codegen_flags: <defaults>
</compile_context>

<pallas_src>
import jax
import jax.numpy as jnp
from jax import lax
from jax.experimental import pallas as pl
from jax.experimental.pallas import tpu as pltpu


# ----------------------------------------------------------------------------
# helpers
# ----------------------------------------------------------------------------
def _round_up(n, m):
    return ((n + m - 1) // m) * m


def _row_tile(n, target):
    """Pick a sublane-aligned row tile (<= target) and the padded row count."""
    t = min(target, _round_up(n, 8))
    return t, _round_up(n, t)


def _l2n(x, eps=1e-24):
    """Row-wise L2 normalization via rsqrt (EUP), matching F.normalize."""
    ss = jnp.sum(x * x, axis=-1, keepdims=True)
    return x * lax.rsqrt(jnp.maximum(ss, eps))


_VMEM_LIMIT = 48 * 1024 * 1024   # safe on v5e/v6e (128 MiB) and v7x (64 MiB)


# ----------------------------------------------------------------------------
# Pallas kernel 1: encoder 1x1 conv as VPU MAC (K is tiny -> MXU useless)
# ----------------------------------------------------------------------------
def _encoder_mac_kernel(x_ref, w_ref, o_ref):
    x = x_ref[...].astype(jnp.float32)          # (T, K)
    w = w_ref[...].astype(jnp.float32)          # (K, C)
    K = w_ref.shape[0]
    acc = x[:, 0:1] * w[0:1, :]
    for k in range(1, K):
        acc = acc + x[:, k:k + 1] * w[k:k + 1, :]
    o_ref[...] = jnp.maximum(acc, 0.0)          # fused ReLU


def encoder_mac(x, w, row_tile=1024):
    M, K = x.shape
    _, C = w.shape
    t, m_pad = _row_tile(M, row_tile)
    if m_pad != M:
        x = jnp.pad(x, ((0, m_pad - M), (0, 0)))
    out = pl.pallas_call(
        _encoder_mac_kernel,
        out_shape=jax.ShapeDtypeStruct((m_pad, C), jnp.float32),
        grid=(m_pad // t,),
        in_specs=[pl.BlockSpec((t, K), lambda i: (i, 0)),
                  pl.BlockSpec((K, C), lambda i: (0, 0))],
        out_specs=pl.BlockSpec((t, C), lambda i: (i, 0)),
        compiler_params=pltpu.CompilerParams(
            dimension_semantics=("parallel",),
            vmem_limit_bytes=_VMEM_LIMIT),
    )(x.astype(jnp.float32), w.astype(jnp.float32))
    return out[:M]


# ----------------------------------------------------------------------------
# Pallas kernel 2: fused fg/bg masked average pooling (single pass over fts)
# ----------------------------------------------------------------------------
def _pool_kernel(fts_ref, mskv_ref, stats_ref):
    @pl.when(pl.program_id(0) == 0)
    def _():
        stats_ref[...] = jnp.zeros_like(stats_ref)

    f = fts_ref[...].astype(jnp.float32)        # (T, C)
    mv = mskv_ref[...]                          # (T, 2): [mask, row_valid]
    m = mv[:, 0:1]
    rv = mv[:, 1:2]
    C = stats_ref.shape[1]
    ones = jnp.ones((1, C), jnp.float32)
    r0 = jnp.sum(f * (m * rv), axis=0, keepdims=True)          # fg numerator
    r1 = jnp.sum(f * ((1.0 - m) * rv), axis=0, keepdims=True)  # bg numerator
    r2 = jnp.sum(m * rv) * ones                                 # n_fg
    r3 = jnp.sum(rv) * ones                                     # n_total
    zz = jnp.zeros((4, C), jnp.float32)
    stats_ref[...] += jnp.concatenate([r0, r1, r2, r3, zz], axis=0)


def masked_pool_fg_bg(fts_flat, mask_flat, row_tile=2048):
    """Single read of fts -> (fg_pool (1,C), bg_pool (1,C)) with +1e-5 denoms."""
    R, C = fts_flat.shape
    t, r_pad = _row_tile(R, row_tile)
    pad = r_pad - R
    f = jnp.pad(fts_flat.astype(jnp.bfloat16), ((0, pad), (0, 0)))
    rvalid = jnp.pad(jnp.ones((R, 1), jnp.float32), ((0, pad), (0, 0)))
    m = jnp.pad(mask_flat.astype(jnp.float32), ((0, pad), (0, 0)))
    mskv = jnp.concatenate([m, rvalid], axis=-1)
    stats = pl.pallas_call(
        _pool_kernel,
        out_shape=jax.ShapeDtypeStruct((8, C), jnp.float32),
        grid=(r_pad // t,),
        in_specs=[pl.BlockSpec((t, C), lambda i: (i, 0)),
                  pl.BlockSpec((t, 2), lambda i: (i, 0))],
        out_specs=pl.BlockSpec((8, C), lambda i: (0, 0)),
        compiler_params=pltpu.CompilerParams(
            dimension_semantics=("arbitrary",),
            vmem_limit_bytes=_VMEM_LIMIT),
    )(f, mskv)
    n_fg = stats[2, 0]
    n_tot = stats[3, 0]
    fg = stats[0:1, :] / (n_fg + 1e-5)
    bg = stats[1:2, :] / ((n_tot - n_fg) + 1e-5)
    return fg, bg


# ----------------------------------------------------------------------------
# Pallas kernel 3: IFR_FD phase 1 (fg + bg stacked into ONE wide MXU matmul,
#                  HW-tiled accumulation)
# ----------------------------------------------------------------------------
def _ifr_phase1_kernel(qry_ref, sup_ref, mskv_ref, pall_ref, par_ref,
                       num_ref, den_ref, vstats_ref):
    @pl.when(pl.program_id(0) == 0)
    def _():
        num_ref[...] = jnp.zeros_like(num_ref)
        den_ref[...] = jnp.zeros_like(den_ref)
        vstats_ref[...] = jnp.zeros_like(vstats_ref)

    scale1 = par_ref[0]
    qb = qry_ref[...]                                   # bf16 (T, C)
    sb = sup_ref[...]
    qf = qb.astype(jnp.float32)
    sf = sb.astype(jnp.float32)
    mv = mskv_ref[...]                                  # (T, 2)
    msk = mv[:, 0:1]
    rv = mv[:, 1:2]

    qn = qf * lax.rsqrt(jnp.maximum(jnp.sum(qf * qf, axis=-1, keepdims=True),
                                    1e-24))
    sn = sf * lax.rsqrt(jnp.maximum(jnp.sum(sf * sf, axis=-1, keepdims=True),
                                    1e-24))
    qnb = qn.astype(jnp.bfloat16)

    # fused fg+bg prototype bank: single wide cosine-sim matmul (T, 2*Np_pad)
    sim = lax.dot_general(qnb, pall_ref[...], (((1,), (1,)), ((), ())),
                          preferred_element_type=jnp.float32)
    pm = jax.nn.sigmoid(sim * scale1) * rv
    # pseudo-mask pooling numerators: single (2*Np_pad, C) MXU matmul
    num_ref[...] += lax.dot_general(
        pm.astype(jnp.bfloat16), qb, (((0,), (0,)), ((), ())),
        preferred_element_type=jnp.float32)
    den_ref[...] += jnp.sum(pm, axis=0, keepdims=True)            # (1, 2*Np)

    # fuse-factor (get_fuse_factor) separable terms
    sel_fg = jnp.where(msk > 0.0, 1.0, 0.0) * rv
    sel_bg = jnp.where(msk < 1.0, 1.0, 0.0) * rv        # (1 - msk) > 0
    C = vstats_ref.shape[1]
    ones = jnp.ones((1, C), jnp.float32)
    r0 = jnp.sum(sn * sel_fg, axis=0, keepdims=True)
    r1 = jnp.sum(sn * sel_bg, axis=0, keepdims=True)
    r2 = jnp.sum(qn * rv, axis=0, keepdims=True)
    r3 = jnp.sum(sel_fg) * ones
    r4 = jnp.sum(sel_bg) * ones
    r5 = jnp.sum(msk * rv) * ones
    zz = jnp.zeros((2, C), jnp.float32)
    vstats_ref[...] += jnp.concatenate([r0, r1, r2, r3, r4, r5, zz], axis=0)


def ifr_phase1(qry_bf, sup_bf, mskv, ptsn_all, scale1, row_tile):
    HW_pad, C = qry_bf.shape
    Np2 = ptsn_all.shape[0]                     # == 2 * Np_pad
    t = row_tile
    par = jnp.stack([jnp.asarray(scale1, jnp.float32),
                     jnp.float32(0.0), jnp.float32(0.0), jnp.float32(0.0)])
    cost = pl.CostEstimate(
        flops=4 * HW_pad * C * Np2,
        transcendentals=HW_pad * Np2,
        bytes_accessed=(2 * HW_pad * C * 2 + HW_pad * 2 * 4
                        + Np2 * C * 2 + Np2 * C * 4 + Np2 * 4 + 8 * C * 4))
    return pl.pallas_call(
        _ifr_phase1_kernel,
        out_shape=(jax.ShapeDtypeStruct((Np2, C), jnp.float32),
                   jax.ShapeDtypeStruct((1, Np2), jnp.float32),
                   jax.ShapeDtypeStruct((8, C), jnp.float32)),
        grid=(HW_pad // t,),
        in_specs=[pl.BlockSpec((t, C), lambda i: (i, 0)),
                  pl.BlockSpec((t, C), lambda i: (i, 0)),
                  pl.BlockSpec((t, 2), lambda i: (i, 0)),
                  pl.BlockSpec((Np2, C), lambda i: (0, 0)),
                  pl.BlockSpec(memory_space=pltpu.MemorySpace.SMEM)],
        out_specs=(pl.BlockSpec((Np2, C), lambda i: (0, 0)),
                   pl.BlockSpec((1, Np2), lambda i: (0, 0)),
                   pl.BlockSpec((8, C), lambda i: (0, 0))),
        compiler_params=pltpu.CompilerParams(
            dimension_semantics=("arbitrary",),
            vmem_limit_bytes=_VMEM_LIMIT),
        cost_estimate=cost,
    )(qry_bf, sup_bf, mskv, ptsn_all, par)


# ----------------------------------------------------------------------------
# Pallas kernel 4: IFR_FD phase 2 (single wide sim matmul, per-branch softmax,
#                  decoder folded in, parallel over HW tiles)
# ----------------------------------------------------------------------------
def _ifr_phase2_kernel(qry_ref, pall_ref, auxn_ref, auxc_ref, par_ref, out_ref):
    qf = qry_ref[...].astype(jnp.float32)               # (T, C)
    qn = qf * lax.rsqrt(jnp.maximum(jnp.sum(qf * qf, axis=-1, keepdims=True),
                                    1e-24))
    qnb = qn.astype(jnp.bfloat16)
    scale0 = par_ref[0]
    auxn = auxn_ref[...]                                # (4, Np_pad)
    auxc = auxc_ref[...]                                # (2, C)
    Np = auxn_ref.shape[1]

    # one wide similarity matmul against [fg_pts; bg_pts]  ->  (T, 2*Np_pad)
    sim_all = lax.dot_general(qnb, pall_ref[...], (((1,), (1,)), ((), ())),
                              preferred_element_type=jnp.float32)

    def branch(sim, pw_row, bias_row, wq_row, w_sim):
        z = sim * scale0 + bias_row                     # -1e30 on padded cols
        z = z - jnp.max(z, axis=-1, keepdims=True)
        e = jnp.exp(z)
        inv = pl.reciprocal(jnp.sum(e, axis=-1, keepdims=True), approx=True)
        sm = e * inv                                    # softmax over Np
        sim0 = jnp.sum(sim * sm, axis=-1, keepdims=True)
        # decoder: qry @ w_q + (sim_map @ pts_new) @ w_m + sim0 * w_s
        mterm = jnp.sum(sm * pw_row, axis=-1, keepdims=True)
        qterm = jnp.sum(qf * wq_row, axis=-1, keepdims=True)
        return qterm + mterm + sim0 * w_sim

    lf = branch(sim_all[:, :Np], auxn[0:1, :], auxn[2:3, :],
                auxc[0:1, :], par_ref[1])
    lb = branch(sim_all[:, Np:], auxn[1:2, :], auxn[3:4, :],
                auxc[1:2, :], par_ref[2])
    out_ref[...] = jnp.concatenate([lf, lb], axis=-1)


def ifr_phase2(qry_bf, pnn_all, aux_np, aux_c, par, row_tile):
    HW_pad, C = qry_bf.shape
    Np2 = pnn_all.shape[0]
    Np_pad = Np2 // 2
    t = row_tile
    cost = pl.CostEstimate(
        flops=2 * HW_pad * C * Np2,
        transcendentals=HW_pad * Np2,
        bytes_accessed=(HW_pad * C * 2 + Np2 * C * 2
                        + HW_pad * 2 * 4 + (4 * Np_pad + 2 * C) * 4))
    return pl.pallas_call(
        _ifr_phase2_kernel,
        out_shape=jax.ShapeDtypeStruct((HW_pad, 2), jnp.float32),
        grid=(HW_pad // t,),
        in_specs=[pl.BlockSpec((t, C), lambda i: (i, 0)),
                  pl.BlockSpec((Np2, C), lambda i: (0, 0)),
                  pl.BlockSpec((4, Np_pad), lambda i: (0, 0)),
                  pl.BlockSpec((2, C), lambda i: (0, 0)),
                  pl.BlockSpec(memory_space=pltpu.MemorySpace.SMEM)],
        out_specs=pl.BlockSpec((t, 2), lambda i: (i, 0)),
        compiler_params=pltpu.CompilerParams(
            dimension_semantics=("parallel",),
            vmem_limit_bytes=_VMEM_LIMIT),
        cost_estimate=cost,
    )(qry_bf, pnn_all, aux_np, aux_c, par)


# ----------------------------------------------------------------------------
# Plain-JAX glue (bilinear resize as matmuls, CI via windowed sums, wiring)
# ----------------------------------------------------------------------------
def _interp_matrix(out_size, in_size, align_corners):
    if align_corners:
        pos = (jnp.linspace(0.0, in_size - 1.0, out_size)
               if out_size > 1 else jnp.zeros((out_size,), jnp.float32))
    else:
        scale = in_size / out_size
        pos = jnp.clip((jnp.arange(out_size, dtype=jnp.float32) + 0.5) * scale
                       - 0.5, 0.0, in_size - 1.0)
    lo = jnp.floor(pos).astype(jnp.int32)
    hi = jnp.minimum(lo + 1, in_size - 1)
    frac = pos - lo.astype(jnp.float32)
    return (jax.nn.one_hot(lo, in_size, dtype=jnp.float32) * (1.0 - frac)[:, None]
            + jax.nn.one_hot(hi, in_size, dtype=jnp.float32) * frac[:, None])


def bilinear_resize(x, out_h, out_w, align_corners):
    """(N,H,W,C) -> (N,out_h,out_w,C): interpolation as two small matmuls
    (MXU-friendly) instead of advanced-indexing gathers."""
    _, H, W, _ = x.shape
    my = _interp_matrix(out_h, H, align_corners)
    mx = _interp_matrix(out_w, W, align_corners)
    y = jnp.einsum('oh,nhwc->nowc', my, x.astype(jnp.float32))
    return jnp.einsum('pw,nowc->nopc', mx, y)


def encoder_stub(enc_w, imgs_nchw):
    """Deterministic stand-in for Res101Encoder: 1x1 conv (Pallas VPU MAC) +
    ReLU + 2x2 average pool; also returns deterministic `tao` thresholds."""
    # TODO(synk): Res101Encoder is external to the provided module; replaced by
    # a deterministic synthetic feature extractor with the same interface.
    N, Cin, H, W = imgs_nchw.shape
    C = enc_w.shape[1]
    x = jnp.transpose(imgs_nchw, (0, 2, 3, 1)).reshape(N * H * W, Cin)
    f = encoder_mac(x, enc_w).reshape(N, H, W, C)
    f = f.reshape(N, H // 2, 2, W // 2, 2, C).mean(axis=(2, 4))   # (N, h, w, C)
    tao = 0.1 + 0.05 * jnp.arange(N, dtype=jnp.float32)            # thresh_pred
    return f, tao


def ci_simplified(fts_img, mask_img, fg_global, bg_global, kernel_size, stride):
    """Simplified FewShotSeg.CI: global masked protos (reused) + all
    sliding-window patch protos via box-filter sums (no patch blow-up)."""
    # TODO(synk): the reference's data-dependent patch filtering (fg_indx /
    # bg_indx thresholds), random.sample subsampling and random-bbox prototype
    # mining produce data-dependent shapes and use torch RNG; they are omitted.
    _, H, W, C = fts_img.shape
    kh, kw = kernel_size
    m4 = mask_img[..., None].astype(jnp.float32)
    f4 = fts_img.astype(jnp.float32)
    win = (1, kh, kw, 1)
    strides = (1, stride, stride, 1)
    sum_fm = lax.reduce_window(f4 * m4, 0.0, lax.add, win, strides, 'VALID')
    sum_f = lax.reduce_window(f4, 0.0, lax.add, win, strides, 'VALID')
    sum_m = lax.reduce_window(m4, 0.0, lax.add, win, strides, 'VALID')
    P = sum_fm.shape[1] * sum_fm.shape[2]
    sum_fm = sum_fm.reshape(P, C)
    sum_f = sum_f.reshape(P, C)
    sum_m = sum_m.reshape(P, 1)
    fg_patch = sum_fm / (sum_m + 1e-5)
    bg_patch = (sum_f - sum_fm) / ((kh * kw - sum_m) + 1e-5)
    fg_pts = jnp.concatenate([fg_global, fg_patch], axis=0)
    bg_pts = jnp.concatenate([bg_global, bg_patch], axis=0)
    return bg_pts, fg_pts


def ifr_fd_fused(fg_pts, bg_pts, qry_feat, sup_feat, mask_img, tao,
                 fuse_w, dec1_w, dec2_w, scaler,
                 row_tile1=512, row_tile2=1024):
    """Fused fg+bg IFR_FD with the 1x1-conv decoders folded in.
    Returns (fg_logit, bg_logit), each (1, h, w, 1)."""
    _, h, w, C = qry_feat.shape
    HW = h * w
    Np_fg = fg_pts.shape[0]
    Np_bg = bg_pts.shape[0]
    Np_pad = max(128, _round_up(max(Np_fg, Np_bg), 128))   # lane-dense Np

    def pad_pts(p):
        return jnp.pad(p.astype(jnp.float32),
                       ((0, Np_pad - p.shape[0]), (0, 0)))

    pts_fg = pad_pts(fg_pts)
    pts_bg = pad_pts(bg_pts)
    pts_all = jnp.concatenate([pts_fg, pts_bg], axis=0)     # (2*Np_pad, C)
    ptsn_all = _l2n(pts_all).astype(jnp.bfloat16)

    # bilinear downsample of the image-res mask (bg branch uses 1 - mask, whose
    # bilinear downsample is exactly 1 - downsampled(mask))
    msk_feat = bilinear_resize(mask_img[..., None], h, w,
                               align_corners=False).reshape(HW, 1)

    t1, hw_pad = _row_tile(HW, row_tile1)
    pad = hw_pad - HW
    qry_flat = qry_feat[0].reshape(HW, C)
    sup_flat = sup_feat[0].reshape(HW, C)
    qry_bf = jnp.pad(qry_flat.astype(jnp.bfloat16), ((0, pad), (0, 0)))
    sup_bf = jnp.pad(sup_flat.astype(jnp.bfloat16), ((0, pad), (0, 0)))
    rvalid = jnp.pad(jnp.ones((HW, 1), jnp.float32), ((0, pad), (0, 0)))
    mskv = jnp.concatenate(
        [jnp.pad(msk_feat.astype(jnp.float32), ((0, pad), (0, 0))), rvalid],
        axis=-1)

    scale1 = 1.0 + scaler * jax.nn.sigmoid(tao[1])   # thresh_pred[i+1], i == 0
    scale0 = 1.0 + scaler * jax.nn.sigmoid(tao[0])   # thresh_pred[0]

    num_all, den, vstats = ifr_phase1(qry_bf, sup_bf, mskv, ptsn_all, scale1,
                                      row_tile=t1)
    num_fg, num_bg = num_all[:Np_pad], num_all[Np_pad:]
    den_fg, den_bg = den[0, :Np_pad], den[0, Np_pad:]

    valid_fg = (jnp.arange(Np_pad) < Np_fg)[:, None]
    valid_bg = (jnp.arange(Np_pad) < Np_bg)[:, None]
    upd_fg = jnp.where(valid_fg, num_fg / (den_fg[:, None] + 1e-5), 0.0)
    upd_bg = jnp.where(valid_bg, num_bg / (den_bg[:, None] + 1e-5), 0.0)

    v_sup_fg, v_sup_bg, v_qry = vstats[0], vstats[1], vstats[2]
    cnt_fg, cnt_bg, msum = vstats[3, 0], vstats[4, 0], vstats[5, 0]
    hwf = jnp.float32(HW)

    def fuse_factor(v_sup, cnt, msum_branch):
        g = jax.nn.sigmoid(jnp.sum(v_sup * v_qry) /
                           jnp.maximum(cnt * hwf, 1.0))
        # TODO(synk): reference tests `mask_.sum() == 0` with exact float
        # equality on the bilinearly-downsampled mask; a small epsilon is used
        # here for numerical robustness.
        return jnp.where(msum_branch > 1e-6, g, 0.0)

    G_fg = fuse_factor(v_sup_fg, cnt_fg, msum)
    G_bg = fuse_factor(v_sup_bg, cnt_bg, hwf - msum)

    def update(pts, upd, G):
        # pts <- pts + fuse([pts*(1-G), upd*G])  (1x1 conv, no bias)
        return pts + fuse_w[0] * pts * (1.0 - G) + fuse_w[1] * upd * G

    new_fg = update(pts_fg, upd_fg, G_fg)
    new_bg = update(pts_bg, upd_bg, G_bg)
    new_all = jnp.concatenate([new_fg, new_bg], axis=0)
    pnn_all = _l2n(new_all).astype(jnp.bfloat16)

    # fused decoder (1x1 conv, no bias):
    #   logit = qry @ w[:C] + matched @ w[C:2C] + sim0 * w[2C]
    # with matched = sim_map @ pts_new  =>  matched @ w = sim_map @ (pts_new @ w)
    wq_fg, wm_fg, ws_fg = dec1_w[:C, 0], dec1_w[C:2 * C, 0], dec1_w[2 * C, 0]
    wq_bg, wm_bg, ws_bg = dec2_w[:C, 0], dec2_w[C:2 * C, 0], dec2_w[2 * C, 0]
    pw_fg = new_fg @ wm_fg
    pw_bg = new_bg @ wm_bg
    bias_fg = jnp.where(jnp.arange(Np_pad) < Np_fg, 0.0, -1e30)
    bias_bg = jnp.where(jnp.arange(Np_pad) < Np_bg, 0.0, -1e30)
    aux_np = jnp.stack([pw_fg, pw_bg, bias_fg, bias_bg],
                       axis=0).astype(jnp.float32)
    aux_c = jnp.stack([wq_fg, wq_bg], axis=0).astype(jnp.float32)
    par2 = jnp.stack([jnp.asarray(scale0, jnp.float32),
                      jnp.asarray(ws_fg, jnp.float32),
                      jnp.asarray(ws_bg, jnp.float32),
                      jnp.float32(0.0)])

    t2, hw_pad2 = _row_tile(HW, row_tile2)
    if hw_pad2 != hw_pad:
        qry_bf2 = jnp.pad(qry_flat.astype(jnp.bfloat16),
                          ((0, hw_pad2 - HW), (0, 0)))
    else:
        qry_bf2 = qry_bf
    logits = ifr_phase2(qry_bf2, pnn_all, aux_np, aux_c, par2,
                        row_tile=t2)[:HW]
    fg_logit = logits[:, 0].reshape(1, h, w, 1)
    bg_logit = logits[:, 1].reshape(1, h, w, 1)
    return fg_logit, bg_logit


def few_shot_seg_forward(params, supp_imgs, supp_mask, qry_imgs, train=False):
    """FewShotSeg.forward (inference path).  Torch layout at the boundary:
       supp_imgs: way x shot x [B, 3, H, W];  supp_mask: way x shot x [B, H, W]
       qry_imgs:  N x [B, 3, H, W]."""
    scaler = 20.0
    kernel, stride = (16, 8), 8

    n_ways, n_shots, n_queries = len(supp_imgs), len(supp_imgs[0]), len(qry_imgs)
    assert n_ways == 1 and n_queries == 1
    supp_bs = supp_imgs[0][0].shape[0]
    qry_bs = qry_imgs[0].shape[0]
    H, W = supp_imgs[0][0].shape[-2:]

    supp_mask_arr = jnp.stack(
        [jnp.stack(way, axis=0) for way in supp_mask], axis=0
    ).reshape(supp_bs, n_ways, n_shots, H, W).astype(jnp.float32)

    imgs_concat = jnp.concatenate(
        [jnp.concatenate(way, axis=0) for way in supp_imgs]
        + [jnp.concatenate(qry_imgs, axis=0)], axis=0)

    feats, tao = encoder_stub(params['enc_w'], imgs_concat)   # (N, h, w, C)
    _, h, w, C = feats.shape
    supp_fts = feats[:n_ways * n_shots * supp_bs].reshape(
        supp_bs, n_ways, n_shots, h, w, C)
    qry_fts = feats[n_ways * n_shots * supp_bs:].reshape(
        qry_bs, n_queries, h, w, C)

    outputs = []
    for epi in range(supp_bs):
        way, shot = 0, 0
        supp_ft_img = bilinear_resize(supp_fts[epi, way, shot][None],
                                      H, W, align_corners=True)   # (1,H,W,C)
        mask_img = supp_mask_arr[epi, way, shot][None]             # (1,H,W)

        # one pass over the upsampled features -> both global prototypes.
        # (the reference recomputes the same global pools for `prototype` /
        #  `bg_prototype`; IFR_FD strips the appended copy and never uses it,
        #  so it is deduplicated here.)
        ft_flat = supp_ft_img.reshape(H * W, C)
        m_flat = mask_img.reshape(H * W, 1)
        fg_global, bg_global = masked_pool_fg_bg(ft_flat, m_flat)

        # TODO(synk): the flag==0 branch (mask.sum()==0) of CI is not modeled.
        ci_bg, ci_fg = ci_simplified(supp_ft_img, mask_img,
                                     fg_global, bg_global, kernel, stride)

        qry_feat = qry_fts[0][epi][None]          # (1, h, w, C)
        sup_feat = supp_fts[epi, way, 0][None]    # (1, h, w, C)

        fg_logit, bg_logit = ifr_fd_fused(
            ci_fg, ci_bg, qry_feat, sup_feat, mask_img, tao,
            params['fuse_w'], params['dec1_w'], params['dec2_w'], scaler)

        fg_up = bilinear_resize(fg_logit, H, W, align_corners=True)
        bg_up = bilinear_resize(bg_logit, H, W, align_corners=True)
        preds = jnp.concatenate([bg_up, fg_up], axis=-1)           # (1,H,W,2)
        preds = jax.nn.softmax(preds, axis=-1)
        outputs.append(jnp.transpose(preds, (0, 3, 1, 2)))         # NCHW

    output = jnp.stack(outputs, axis=1)
    output = output.reshape(-1, *output.shape[2:])                 # (B, 2, H, W)

    # TODO(synk): alignLoss / BoundaryLoss only run when train=True; inference
    # path returns zeros just like the reference.
    align_loss = jnp.zeros((1,), jnp.float32)
    b_loss = jnp.zeros((1,), jnp.float32)
    return output, align_loss / supp_bs, b_loss / supp_bs


# ----------------------------------------------------------------------------
if __name__ == "__main__":
    key = jax.random.PRNGKey(0)
    k1, k2, k3, k4, k5 = jax.random.split(key, 5)

    C = 64          # feature channels (reference uses 512)
    H = W = 32      # image size (reference uses 256)

    params = {
        'enc_w': 0.05 * jax.random.normal(k3, (3, C), jnp.float32),
        'dec1_w': 0.05 * jax.random.normal(k4, (2 * C + 1, 1), jnp.float32),
        'dec2_w': 0.05 * jax.random.normal(k5, (2 * C + 1, 1), jnp.float32),
        'fuse_w': jnp.array([0.6, 0.4], jnp.float32),   # Conv2d(2,1,1,bias=False)
    }

    supp_img = jax.random.normal(k1, (1, 3, H, W), jnp.float32)
    qry_img = jax.random.normal(k2, (1, 3, H, W), jnp.float32)
    mask = jnp.zeros((1, H, W), jnp.float32).at[:, 8:24, 8:24].set(1.0)

    supp_imgs = [[supp_img]]     # way x shot x [B,3,H,W]
    supp_mask = [[mask]]         # way x shot x [B,H,W]
    qry_imgs = [qry_img]         # N x [B,3,H,W]

    out, align_loss, b_loss = few_shot_seg_forward(
        params, supp_imgs, supp_mask, qry_imgs, train=False)
    jax.block_until_ready(out)

    assert out.shape == (1, 2, H, W)
    assert bool(jnp.all(jnp.isfinite(out)))
    assert bool(jnp.allclose(out.sum(axis=1), 1.0, atol=1e-4))
    print("KERNEL_OK")
</pallas_src>

<mosaic_0001>
module attributes {stable_mosaic.version = 11 : i64} {
  func.func @_encoder_mac_kernel(%arg0: i32, %arg1: memref<1024x3xf32, #tpu.memory_space<vmem>>, %arg2: memref<3x64xf32, #tpu.memory_space<vmem>>, %arg3: memref<1024x64xf32, #tpu.memory_space<vmem>>) attributes {dimension_semantics = [#tpu.dimension_semantics<parallel>], iteration_bounds = array<i64: 2>, scalar_prefetch = 0 : i64, scratch_operands = 0 : i64, tpu.core_type = #tpu.core_type<tc>, window_params = [{transform_indices = @transform_0, window_bounds = array<i64: 1024, 3>}, {pipeline_mode = #tpu.pipeline_mode<synchronous>, transform_indices = @transform_1, window_bounds = array<i64: 3, 64>}, {transform_indices = @transform_2, window_bounds = array<i64: 1024, 64>}]} {
    %c0 = arith.constant 0 : index
    %c0_0 = arith.constant 0 : index
    %0 = vector.load %arg1[%c0, %c0_0] : memref<1024x3xf32, #tpu.memory_space<vmem>>, vector<1024x3xf32>
    %c0_1 = arith.constant 0 : index
    %c0_2 = arith.constant 0 : index
    %1 = vector.load %arg2[%c0_1, %c0_2] : memref<3x64xf32, #tpu.memory_space<vmem>>, vector<3x64xf32>
    %2 = vector.extract_strided_slice %0 {offsets = [0, 0], sizes = [1024, 1], strides = [1, 1]} : vector<1024x3xf32> to vector<1024x1xf32>
    %3 = vector.extract_strided_slice %1 {offsets = [0, 0], sizes = [1, 64], strides = [1, 1]} : vector<3x64xf32> to vector<1x64xf32>
    %4 = vector.broadcast %2 : vector<1024x1xf32> to vector<1024x64xf32>
    %5 = vector.broadcast %3 : vector<1x64xf32> to vector<1024x64xf32>
    %6 = arith.mulf %4, %5 : vector<1024x64xf32>
    %7 = vector.extract_strided_slice %0 {offsets = [0, 1], sizes = [1024, 1], strides = [1, 1]} : vector<1024x3xf32> to vector<1024x1xf32>
    %8 = vector.extract_strided_slice %1 {offsets = [1, 0], sizes = [1, 64], strides = [1, 1]} : vector<3x64xf32> to vector<1x64xf32>
    %9 = vector.broadcast %7 : vector<1024x1xf32> to vector<1024x64xf32>
    %10 = vector.broadcast %8 : vector<1x64xf32> to vector<1024x64xf32>
    %11 = arith.mulf %9, %10 : vector<1024x64xf32>
    %12 = arith.addf %6, %11 : vector<1024x64xf32>
    %13 = vector.extract_strided_slice %0 {offsets = [0, 2], sizes = [1024, 1], strides = [1, 1]} : vector<1024x3xf32> to vector<1024x1xf32>
    %14 = vector.extract_strided_slice %1 {offsets = [2, 0], sizes = [1, 64], strides = [1, 1]} : vector<3x64xf32> to vector<1x64xf32>
    %15 = vector.broadcast %13 : vector<1024x1xf32> to vector<1024x64xf32>
    %16 = vector.broadcast %14 : vector<1x64xf32> to vector<1024x64xf32>
    %17 = arith.mulf %15, %16 : vector<1024x64xf32>
    %18 = arith.addf %12, %17 : vector<1024x64xf32>
    %cst = arith.constant 0.000000e+00 : f32
    %19 = vector.broadcast %cst : f32 to vector<1024x64xf32>
    %20 = arith.maximumf %18, %19 : vector<1024x64xf32>
    %c0_3 = arith.constant 0 : index
    %c0_4 = arith.constant 0 : index
    %21 = vector.load %arg3[%c0_3, %c0_4] : memref<1024x64xf32, #tpu.memory_space<vmem>>, vector<1024x64xf32>
    tpu.vector_store %arg3[%c0_3, %c0_4], %20 {strides = array<i32>} : memref<1024x64xf32, #tpu.memory_space<vmem>>, vector<1024x64xf32>,
    return
  }
  func.func @transform_0(%arg0: i32) -> (i32, i32) {
    %c0_i32 = arith.constant 0 : i32
    %c0_i32_0 = arith.constant 0 : i32
    return %arg0, %c0_i32 : i32, i32
  }
  func.func @transform_1(%arg0: i32) -> (i32, i32) {
    %c0_i32 = arith.constant 0 : i32
    %c0_i32_0 = arith.constant 0 : i32
    %c0_i32_1 = arith.constant 0 : i32
    return %c0_i32, %c0_i32_0 : i32, i32
  }
  func.func @transform_2(%arg0: i32) -> (i32, i32) {
    %c0_i32 = arith.constant 0 : i32
    %c0_i32_0 = arith.constant 0 : i32
    return %arg0, %c0_i32 : i32, i32
  }
}

</mosaic_0001>

<llo_original>
// kernel: tpu_custom_call.1
$region0: #{tpu_custom_call.1}
  #allocation0 [shape = 'u32[]', space=smem, size = 0x4, offset = 0x4, fixed_abs, tag = 'smem constant byte address 0x4 - core index']
  #allocation1 [shape = 'u32[144,128]{1,0:T(1,128)}', space=vmem, size = 0x12000, scoped, tag = 'internal scratch']
  %s0 = inlined_call_operand.vmem [shape: f32[2048,3], index: 0, kind: input, shape index: {}]
  %s1 = inlined_call_operand.vmem [shape: f32[3,64], index: 1, kind: input, shape index: {}]
  %s2 = inlined_call_operand.vmem [shape: f32[2048,64], index: 2, kind: output, shape index: {}]
  %s3 = sld [smem:[#allocation0]]
  $region41: #{tpu_custom_call.1} parent=0
    _
  %s5 = ssub.s32 1, %s3
  %s6 = scalar_select 0, %s5, %s3
  loop: start=0, step=1, limit=4
  $region2: #{tpu_custom_call.1} parent=0 // loop_pre_header
    _
  $region3: #{tpu_custom_call.1} parent=0 // loop_header
    %s8 = sphi 0, %s12
    %p9 = scmp.ge.s32.totalorder %s8, 4
    %s18 = sphi 0, %s20
    %s21 = sphi 0, %s18
    %s22 = sphi 0, %s21
    %s38 = sphi 0, %s22
    %s42 = sphi 0, %s42
    %s44 = sphi 0, %s42
    %s45 = sphi 0, %s44
    %s59 = sphi 0, %s45
    %s65 = sphi 0, %s67
    %s68 = sphi 0, %s65
    %s69 = sphi 0, %s68
    %s85 = sphi 0, %s69
  $region4: #{tpu_custom_call.1} parent=0 // loop_header_branch
    %11 = sbr.rel (%p9) target = $region8
  $region5: #{tpu_custom_call.1} parent=0 // loop_body
    %s13 = ssub.s32 %s8, 1
    %s14 = ssub.s32 %s8, 2
    %s15 = sadd.s32 %s8, 1
    %s16 = ssub.s32 %s8, %s15
    %p17 = scmp.eq.s32.totalorder %s16, 0
    %s19 = sadd.s32 %s18, 1
    %s20 = scalar_select %p17, %s18, %s19
    %p23 = pneg %p17
    %p24 = scmp.eq.s32.totalorder %s8, 1
    %p25 = por %p23, %p24
    %p26 = scmp.ne.s32.totalorder %s18, %s21
    %p27 = scmp.eq.s32.totalorder %s8, 0
    %p28 = por %p26, %p27
    %p29 = scmp.ne.s32.totalorder %s18, %s21
    %p30 = scmp.eq.s32.totalorder %s13, 1
    %p31 = por %p29, %p30
    %p32 = scmp.ne.s32.totalorder %s21, %s22
    %p33 = scmp.eq.s32.totalorder %s13, 0
    %p34 = por %p32, %p33
    %p35 = scmp.ne.s32.totalorder %s21, %s22
    %p36 = scmp.eq.s32.totalorder %s14, 1
    %p37 = por %p35, %p36
    %p39 = scmp.ne.s32.totalorder %s22, %s38
    %p40 = scmp.eq.s32.totalorder %s14, 0
    %p41 = por %p39, %p40
    %s43 = sadd.s32 %s42, 1
    %p46 = scmp.eq.s32.totalorder %s8, 1
    %p47 = scmp.ne.s32.totalorder %s42, %s44
    %p48 = scmp.eq.s32.totalorder %s8, 0
    %p49 = por %p47, %p48
    %p50 = scmp.ne.s32.totalorder %s42, %s44
    %p51 = scmp.eq.s32.totalorder %s13, 1
    %p52 = por %p50, %p51
    %p53 = scmp.ne.s32.totalorder %s44, %s45
    %p54 = scmp.eq.s32.totalorder %s13, 0
    %p55 = por %p53, %p54
    %p56 = scmp.ne.s32.totalorder %s44, %s45
    %p57 = scmp.eq.s32.totalorder %s14, 1
    %p58 = por %p56, %p57
    %p60 = scmp.ne.s32.totalorder %s45, %s59
    %p61 = scmp.eq.s32.totalorder %s14, 0
    %p62 = por %p60, %p61
    %s63 = ssub.s32 %s8, %s15
    %p64 = scmp.eq.s32.totalorder %s63, 0
    %s66 = sadd.s32 %s65, 1
    %s67 = scalar_select %p64, %s65, %s66
    %p70 = pneg %p64
    %p71 = scmp.eq.s32.totalorder %s8, 1
    %p72 = por %p70, %p71
    %p73 = scmp.ne.s32.totalorder %s65, %s68
    %p74 = scmp.eq.s32.totalorder %s8, 0
    %p75 = por %p73, %p74
    %p76 = scmp.ne.s32.totalorder %s65, %s68
    %p77 = scmp.eq.s32.totalorder %s13, 1
    %p78 = por %p76, %p77
    %p79 = scmp.ne.s32.totalorder %s68, %s69
    %p80 = scmp.eq.s32.totalorder %s13, 0
    %p81 = por %p79, %p80
    %p82 = scmp.ne.s32.totalorder %s68, %s69
    %p83 = scmp.eq.s32.totalorder %s14, 1
    %p84 = por %p82, %p83
    %p86 = scmp.ne.s32.totalorder %s69, %s85
    %p87 = scmp.eq.s32.totalorder %s14, 0
    %p88 = por %p86, %p87
    %p89 = scmp.le.s32.totalorder 1, %s8
    %p90 = scmp.lt.s32.totalorder %s8, 3
    %p91 = pnand %p89, %p90
    %p92 = pneg %p91
    // Predicated region
    $region9: #{tpu_custom_call.1} parent=5 // pred_check
      _
    $region10: #{tpu_custom_call.1} parent=5 // pred_check_branch
      %94 = sbr.rel (%p91) target = $region12
    $region11: #{tpu_custom_call.1} parent=5 // pred_region
      %s95 = ssub.s32 %s8, 1
      // Predicated region
      $region13: #{tpu_custom_call.1} parent=11 // pred_check
        %p96 = pneg %p55
      $region14: #{tpu_custom_call.1} parent=11 // pred_check_branch
        %98 = sbr.rel (%p96) target = $region16
      $region15: #{tpu_custom_call.1} parent=11 // pred_region
        _
      $region16: #{tpu_custom_call.1} parent=11 // pred_fallthru
        _
    $region12: #{tpu_custom_call.1} parent=5 // pred_fallthru
      _
    %p99 = scmp.lt.s32.totalorder %s8, 2
    // Predicated region
    $region17: #{tpu_custom_call.1} parent=5 // pred_check
      %p100 = pneg %p99
    $region18: #{tpu_custom_call.1} parent=5 // pred_check_branch
      %102 = sbr.rel (%p100) target = $region20
    $region19: #{tpu_custom_call.1} parent=5 // pred_region
      // Predicated region
      $region21: #{tpu_custom_call.1} parent=19 // pred_check
        %p103 = pneg %p28
      $region22: #{tpu_custom_call.1} parent=19 // pred_check_branch
        %105 = sbr.rel (%p103) target = $region24
      $region23: #{tpu_custom_call.1} parent=19 // pred_region
        %s106 = smul.u32 128, %s8
        %p107 = scmp.lt.s32.totalorder %s106, 255
        %s108 = scalar_select %p107, %s106, 255
        %s109 = smul.addr %s108, 8
        %s110 = scalar_lea.vmem %s0, %s109
        %s111 = smul.u32 128, %s8
      $region24: #{tpu_custom_call.1} parent=19 // pred_fallthru
        _
    $region20: #{tpu_custom_call.1} parent=5 // pred_fallthru
      _
    %p112 = scmp.le.s32.totalorder 1, %s8
    %p113 = scmp.lt.s32.totalorder %s8, 3
    %p114 = pnand %p112, %p113
    %p115 = pneg %p114
    // Predicated region
    $region25: #{tpu_custom_call.1} parent=5 // pred_check
      _
    $region26: #{tpu_custom_call.1} parent=5 // pred_check_branch
      %117 = sbr.rel (%p114) target = $region28
    $region27: #{tpu_custom_call.1} parent=5 // pred_region
      %s118 = ssub.s32 %s8, 1
      %s119 = smul.u32 128, %s13
      %p120 = scmp.lt.s32.totalorder %s119, 255
      %s121 = scalar_select %p120, %s119, 255
      %s122 = smul.addr %s121, 8
      %s123 = scalar_lea.vmem %s0, %s122
      %p124 = pneg %p34
      %p125 = pneg %p31
      %p126 = pneg %p55
      %p127 = pneg %p52
      %p128 = pneg %p81
      %p129 = pneg %p78
      %s130 = smul.u32 128, %s13
      %p131 = scmp.lt.s32.totalorder %s130, 255
      %s132 = scalar_select %p131, %s130, 255
      %s133 = smul.addr %s132, 8
      %s134 = scalar_lea.vmem %s2, %s133
      %s135 = smul.u32 128, %s13
      %p136 = scmp.lt.s32.totalorder %s135, 255
      %s137 = scalar_select %p136, %s135, 255
      %s138 = smul.addr %s137, 8
      %s139 = scalar_lea.vmem %s0, %s138
      %s140 = smul.u32 128, %s13
      %s141 = smul.u32 128, %s13
      %p142 = scmp.lt.s32.totalorder %s141, 255
      %s143 = scalar_select %p142, %s141, 255
      %s144 = smul.addr %s143, 8
      %s145 = scalar_lea.vmem %s2, %s144
      %s146 = smul.u32 128, %s13
      %v147 = vld [vmem:[%s139] sm:$0xff]
      %v148 = vld [vmem:[%s139 + $0x8] sm:$0xff]
      %v149 = vld [vmem:[%s139 + $0x10] sm:$0xff]
      %v150 = vld [vmem:[%s139 + $0x18] sm:$0xff]
      %v151 = vld [vmem:[%s139 + $0x20] sm:$0xff]
      %v152 = vld [vmem:[%s139 + $0x28] sm:$0xff]
      %v153 = vld [vmem:[%s139 + $0x30] sm:$0xff]
      %v154 = vld [vmem:[%s139 + $0x38] sm:$0xff]
      %v155 = vld [vmem:[%s139 + $0x40] sm:$0xff]
      %v156 = vld [vmem:[%s139 + $0x48] sm:$0xff]
      %v157 = vld [vmem:[%s139 + $0x50] sm:$0xff]
      %v158 = vld [vmem:[%s139 + $0x58] sm:$0xff]
      %v159 = vld [vmem:[%s139 + $0x60] sm:$0xff]
      %v160 = vld [vmem:[%s139 + $0x68] sm:$0xff]
      %v161 = vld [vmem:[%s139 + $0x70] sm:$0xff]
      %v162 = vld [vmem:[%s139 + $0x78] sm:$0xff]
      %v163 = vld [vmem:[%s139 + $0x80] sm:$0xff]
      %v164 = vld [vmem:[%s139 + $0x88] sm:$0xff]
      %v165 = vld [vmem:[%s139 + $0x90] sm:$0xff]
      %v166 = vld [vmem:[%s139 + $0x98] sm:$0xff]
      %v167 = vld [vmem:[%s139 + $0xa0] sm:$0xff]
      %v168 = vld [vmem:[%s139 + $0xa8] sm:$0xff]
      %v169 = vld [vmem:[%s139 + $0xb0] sm:$0xff]
      %v170 = vld [vmem:[%s139 + $0xb8] sm:$0xff]
      %v171 = vld [vmem:[%s139 + $0xc0] sm:$0xff]
      %v172 = vld [vmem:[%s139 + $0xc8] sm:$0xff]
      %v173 = vld [vmem:[%s139 + $0xd0] sm:$0xff]
      %v174 = vld [vmem:[%s139 + $0xd8] sm:$0xff]
      %v175 = vld [vmem:[%s139 + $0xe0] sm:$0xff]
      %v176 = vld [vmem:[%s139 + $0xe8] sm:$0xff]
      %v177 = vld [vmem:[%s139 + $0xf0] sm:$0xff]
      %v178 = vld [vmem:[%s139 + $0xf8] sm:$0xff]
      %v179 = vld [vmem:[%s139 + $0x100] sm:$0xff]
      %v180 = vld [vmem:[%s139 + $0x108] sm:$0xff]
      %v181 = vld [vmem:[%s139 + $0x110] sm:$0xff]
      %v182 = vld [vmem:[%s139 + $0x118] sm:$0xff]
      %v183 = vld [vmem:[%s139 + $0x120] sm:$0xff]
      %v184 = vld [vmem:[%s139 + $0x128] sm:$0xff]
      %v185 = vld [vmem:[%s139 + $0x130] sm:$0xff]
      %v186 = vld [vmem:[%s139 + $0x138] sm:$0xff]
      %v187 = vld [vmem:[%s139 + $0x140] sm:$0xff]
      %v188 = vld [vmem:[%s139 + $0x148] sm:$0xff]
      %v189 = vld [vmem:[%s139 + $0x150] sm:$0xff]
      %v190 = vld [vmem:[%s139 + $0x158] sm:$0xff]
      %v191 = vld [vmem:[%s139 + $0x160] sm:$0xff]
      %v192 = vld [vmem:[%s139 + $0x168] sm:$0xff]
      %v193 = vld [vmem:[%s139 + $0x170] sm:$0xff]
      %v194 = vld [vmem:[%s139 + $0x178] sm:$0xff]
      %v195 = vld [vmem:[%s139 + $0x180] sm:$0xff]
      %v196 = vld [vmem:[%s139 + $0x188] sm:$0xff]
      %v197 = vld [vmem:[%s139 + $0x190] sm:$0xff]
      %v198 = vld [vmem:[%s139 + $0x198] sm:$0xff]
      %v199 = vld [vmem:[%s139 + $0x1a0] sm:$0xff]
      %v200 = vld [vmem:[%s139 + $0x1a8] sm:$0xff]
      %v201 = vld [vmem:[%s139 + $0x1b0] sm:$0xff]
      %v202 = vld [vmem:[%s139 + $0x1b8] sm:$0xff]
      %v203 = vld [vmem:[%s139 + $0x1c0] sm:$0xff]
      %v204 = vld [vmem:[%s139 + $0x1c8] sm:$0xff]
      %v205 = vld [vmem:[%s139 + $0x1d0] sm:$0xff]
      %v206 = vld [vmem:[%s139 + $0x1d8] sm:$0xff]
      %v207 = vld [vmem:[%s139 + $0x1e0] sm:$0xff]
      %v208 = vld [vmem:[%s139 + $0x1e8] sm:$0xff]
      %v209 = vld [vmem:[%s139 + $0x1f0] sm:$0xff]
      %v210 = vld [vmem:[%s139 + $0x1f8] sm:$0xff]
      %v211 = vld [vmem:[%s139 + $0x200] sm:$0xff]
      %v212 = vld [vmem:[%s139 + $0x208] sm:$0xff]
      %v213 = vld [vmem:[%s139 + $0x210] sm:$0xff]
      %v214 = vld [vmem:[%s139 + $0x218] sm:$0xff]
      %v215 = vld [vmem:[%s139 + $0x220] sm:$0xff]
      %v216 = vld [vmem:[%s139 + $0x228] sm:$0xff]
      %v217 = vld [vmem:[%s139 + $0x230] sm:$0xff]
      %v218 = vld [vmem:[%s139 + $0x238] sm:$0xff]
      %v219 = vld [vmem:[%s139 + $0x240] sm:$0xff]
      %v220 = vld [vmem:[%s139 + $0x248] sm:$0xff]
      %v221 = vld [vmem:[%s139 + $0x250] sm:$0xff]
      %v222 = vld [vmem:[%s139 + $0x258] sm:$0xff]
      %v223 = vld [vmem:[%s139 + $0x260] sm:$0xff]
      %v224 = vld [vmem:[%s139 + $0x268] sm:$0xff]
      %v225 = vld [vmem:[%s139 + $0x270] sm:$0xff]
      %v226 = vld [vmem:[%s139 + $0x278] sm:$0xff]
      %v227 = vld [vmem:[%s139 + $0x280] sm:$0xff]
      %v228 = vld [vmem:[%s139 + $0x288] sm:$0xff]
      %v229 = vld [vmem:[%s139 + $0x290] sm:$0xff]
      %v230 = vld [vmem:[%s139 + $0x298] sm:$0xff]
      %v231 = vld [vmem:[%s139 + $0x2a0] sm:$0xff]
      %v232 = vld [vmem:[%s139 + $0x2a8] sm:$0xff]
      %v233 = vld [vmem:[%s139 + $0x2b0] sm:$0xff]
      %v234 = vld [vmem:[%s139 + $0x2b8] sm:$0xff]
      %v235 = vld [vmem:[%s139 + $0x2c0] sm:$0xff]
      %v236 = vld [vmem:[%s139 + $0x2c8] sm:$0xff]
      %v237 = vld [vmem:[%s139 + $0x2d0] sm:$0xff]
      %v238 = vld [vmem:[%s139 + $0x2d8] sm:$0xff]
      %v239 = vld [vmem:[%s139 + $0x2e0] sm:$0xff]
      %v240 = vld [vmem:[%s139 + $0x2e8] sm:$0xff]
      %v241 = vld [vmem:[%s139 + $0x2f0] sm:$0xff]
      %v242 = vld [vmem:[%s139 + $0x2f8] sm:$0xff]
      %v243 = vld [vmem:[%s139 + $0x300] sm:$0xff]
      %v244 = vld [vmem:[%s139 + $0x308] sm:$0xff]
      %v245 = vld [vmem:[%s139 + $0x310] sm:$0xff]
      %v246 = vld [vmem:[%s139 + $0x318] sm:$0xff]
      %v247 = vld [vmem:[%s139 + $0x320] sm:$0xff]
      %v248 = vld [vmem:[%s139 + $0x328] sm:$0xff]
      %v249 = vld [vmem:[%s139 + $0x330] sm:$0xff]
      %v250 = vld [vmem:[%s139 + $0x338] sm:$0xff]
      %v251 = vld [vmem:[%s139 + $0x340] sm:$0xff]
      %v252 = vld [vmem:[%s139 + $0x348] sm:$0xff]
      %v253 = vld [vmem:[%s139 + $0x350] sm:$0xff]
      %v254 = vld [vmem:[%s139 + $0x358] sm:$0xff]
      %v255 = vld [vmem:[%s139 + $0x360] sm:$0xff]
      %v256 = vld [vmem:[%s139 + $0x368] sm:$0xff]
      %v257 = vld [vmem:[%s139 + $0x370] sm:$0xff]
      %v258 = vld [vmem:[%s139 + $0x378] sm:$0xff]
      %v259 = vld [vmem:[%s139 + $0x380] sm:$0xff]
      %v260 = vld [vmem:[%s139 + $0x388] sm:$0xff]
      %v261 = vld [vmem:[%s139 + $0x390] sm:$0xff]
      %v262 = vld [vmem:[%s139 + $0x398] sm:$0xff]
      %v263 = vld [vmem:[%s139 + $0x3a0] sm:$0xff]
      %v264 = vld [vmem:[%s139 + $0x3a8] sm:$0xff]
      %v265 = vld [vmem:[%s139 + $0x3b0] sm:$0xff]
      %v266 = vld [vmem:[%s139 + $0x3b8] sm:$0xff]
      %v267 = vld [vmem:[%s139 + $0x3c0] sm:$0xff]
      %v268 = vld [vmem:[%s139 + $0x3c8] sm:$0xff]
      %v269 = vld [vmem:[%s139 + $0x3d0] sm:$0xff]
      %v270 = vld [vmem:[%s139 + $0x3d8] sm:$0xff]
      %v271 = vld [vmem:[%s139 + $0x3e0] sm:$0xff]
      %v272 = vld [vmem:[%s139 + $0x3e8] sm:$0xff]
      %v273 = vld [vmem:[%s139 + $0x3f0] sm:$0xff]
      %v274 = vld [vmem:[%s139 + $0x3f8] sm:$0xff]
      %v275 = vld [vmem:[%s1] sm:$0x7]
      %277 = vset.pattern.permute.xlu0 0
      %278 = vperm.xlu0 %277, %v147
      %v279 = vpop.permute.xlu0 %278
      %282 = vset.pattern.permute.xlu0 0
      %283 = vperm.xlu0 %282, %v148
      %v284 = vpop.permute.xlu0 %283
      %287 = vset.pattern.permute.xlu0 0
      %288 = vperm.xlu0 %287, %v149
      %v289 = vpop.permute.xlu0 %288
      %292 = vset.pattern.permute.xlu0 0
      %293 = vperm.xlu0 %292, %v150
      %v294 = vpop.permute.xlu0 %293
      %297 = vset.pattern.permute.xlu0 0
      %298 = vperm.xlu0 %297, %v151
      %v299 = vpop.permute.xlu0 %298
      %302 = vset.pattern.permute.xlu0 0
      %303 = vperm.xlu0 %302, %v152
      %v304 = vpop.permute.xlu0 %303
      %307 = vset.pattern.permute.xlu0 0
      %308 = vperm.xlu0 %307, %v153
      %v309 = vpop.permute.xlu0 %308
      %312 = vset.pattern.permute.xlu0 0
      %313 = vperm.xlu0 %312, %v154
      %v314 = vpop.permute.xlu0 %313
      %317 = vset.pattern.permute.xlu0 0
      %318 = vperm.xlu0 %317, %v155
      %v319 = vpop.permute.xlu0 %318
      %322 = vset.pattern.permute.xlu0 0
      %323 = vperm.xlu0 %322, %v156
      %v324 = vpop.permute.xlu0 %323
      %327 = vset.pattern.permute.xlu0 0
      %328 = vperm.xlu0 %327, %v157
      %v329 = vpop.permute.xlu0 %328
      %332 = vset.pattern.permute.xlu0 0
      %333 = vperm.xlu0 %332, %v158
      %v334 = vpop.permute.xlu0 %333
      %337 = vset.pattern.permute.xlu0 0
      %338 = vperm.xlu0 %337, %v159
      %v339 = vpop.permute.xlu0 %338
      %342 = vset.pattern.permute.xlu0 0
      %343 = vperm.xlu0 %342, %v160
      %v344 = vpop.permute.xlu0 %343
      %347 = vset.pattern.permute.xlu0 0
      %348 = vperm.xlu0 %347, %v161
      %v349 = vpop.permute.xlu0 %348
      %352 = vset.pattern.permute.xlu0 0
      %353 = vperm.xlu0 %352, %v162
      %v354 = vpop.permute.xlu0 %353
      %357 = vset.pattern.permute.xlu0 0
      %358 = vperm.xlu0 %357, %v163
      %v359 = vpop.permute.xlu0 %358
      %362 = vset.pattern.permute.xlu0 0
      %363 = vperm.xlu0 %362, %v164
      %v364 = vpop.permute.xlu0 %363
      %367 = vset.pattern.permute.xlu0 0
      %368 = vperm.xlu0 %367, %v165
      %v369 = vpop.permute.xlu0 %368
      %372 = vset.pattern.permute.xlu0 0
      %373 = vperm.xlu0 %372, %v166
      %v374 = vpop.permute.xlu0 %373
      %377 = vset.pattern.permute.xlu0 0
      %378 = vperm.xlu0 %377, %v167
      %v379 = vpop.permute.xlu0 %378
      %382 = vset.pattern.permute.xlu0 0
      %383 = vperm.xlu0 %382, %v168
      %v384 = vpop.permute.xlu0 %383
      %387 = vset.pattern.permute.xlu0 0
      %388 = vperm.xlu0 %387, %v169
      %v389 = vpop.permute.xlu0 %388
      %392 = vset.pattern.permute.xlu0 0
      %393 = vperm.xlu0 %392, %v170
      %v394 = vpop.permute.xlu0 %393
      %397 = vset.pattern.permute.xlu0 0
      %398 = vperm.xlu0 %397, %v171
      %v399 = vpop.permute.xlu0 %398
      %402 = vset.pattern.permute.xlu0 0
      %403 = vperm.xlu0 %402, %v172
      %v404 = vpop.permute.xlu0 %403
      %407 = vset.pattern.permute.xlu0 0
      %408 = vperm.xlu0 %407, %v173
      %v409 = vpop.permute.xlu0 %408
      %412 = vset.pattern.permute.xlu0 0
      %413 = vperm.xlu0 %412, %v174
      %v414 = vpop.permute.xlu0 %413
      %417 = vset.pattern.permute.xlu0 0
      %418 = vperm.xlu0 %417, %v175
      %v419 = vpop.permute.xlu0 %418
      %422 = vset.pattern.permute.xlu0 0
      %423 = vperm.xlu0 %422, %v176
      %v424 = vpop.permute.xlu0 %423
      %427 = vset.pattern.permute.xlu0 0
      %428 = vperm.xlu0 %427, %v177
      %v429 = vpop.permute.xlu0 %428
      %432 = vset.pattern.permute.xlu0 0
      %433 = vperm.xlu0 %432, %v178
      %v434 = vpop.permute.xlu0 %433
      %437 = vset.pattern.permute.xlu0 0
      %438 = vperm.xlu0 %437, %v179
      %v439 = vpop.permute.xlu0 %438
      %442 = vset.pattern.permute.xlu0 0
      %443 = vperm.xlu0 %442, %v180
      %v444 = vpop.permute.xlu0 %443
      %447 = vset.pattern.permute.xlu0 0
      %448 = vperm.xlu0 %447, %v181
      %v449 = vpop.permute.xlu0 %448
      %452 = vset.pattern.permute.xlu0 0
      %453 = vperm.xlu0 %452, %v182
      %v454 = vpop.permute.xlu0 %453
      %457 = vset.pattern.permute.xlu0 0
      %458 = vperm.xlu0 %457, %v183
      %v459 = vpop.permute.xlu0 %458
      %462 = vset.pattern.permute.xlu0 0
      %463 = vperm.xlu0 %462, %v184
      %v464 = vpop.permute.xlu0 %463
      %467 = vset.pattern.permute.xlu0 0
      %468 = vperm.xlu0 %467, %v185
      %v469 = vpop.permute.xlu0 %468
      %472 = vset.pattern.permute.xlu0 0
      %473 = vperm.xlu0 %472, %v186
      %v474 = vpop.permute.xlu0 %473
      %477 = vset.pattern.permute.xlu0 0
      %478 = vperm.xlu0 %477, %v187
      %v479 = vpop.permute.xlu0 %478
      %482 = vset.pattern.permute.xlu0 0
      %483 = vperm.xlu0 %482, %v188
      %v484 = vpop.permute.xlu0 %483
      %487 = vset.pattern.permute.xlu0 0
      %488 = vperm.xlu0 %487, %v189
      %v489 = vpop.permute.xlu0 %488
      %492 = vset.pattern.permute.xlu0 0
      %493 = vperm.xlu0 %492, %v190
      %v494 = vpop.permute.xlu0 %493
      %497 = vset.pattern.permute.xlu0 0
      %498 = vperm.xlu0 %497, %v191
      %v499 = vpop.permute.xlu0 %498
      %502 = vset.pattern.permute.xlu0 0
      %503 = vperm.xlu0 %502, %v192
      %v504 = vpop.permute.xlu0 %503
      %507 = vset.pattern.permute.xlu0 0
      %508 = vperm.xlu0 %507, %v193
      %v509 = vpop.permute.xlu0 %508
      %512 = vset.pattern.permute.xlu0 0
      %513 = vperm.xlu0 %512, %v194
      %v514 = vpop.permute.xlu0 %513
      %517 = vset.pattern.permute.xlu0 0
      %518 = vperm.xlu0 %517, %v195
      %v519 = vpop.permute.xlu0 %518
      %522 = vset.pattern.permute.xlu0 0
      %523 = vperm.xlu0 %522, %v196
      %v524 = vpop.permute.xlu0 %523
      %527 = vset.pattern.permute.xlu0 0
      %528 = vperm.xlu0 %527, %v197
      %v529 = vpop.permute.xlu0 %528
      %532 = vset.pattern.permute.xlu0 0
      %533 = vperm.xlu0 %532, %v198
      %v534 = vpop.permute.xlu0 %533
      %537 = vset.pattern.permute.xlu0 0
      %538 = vperm.xlu0 %537, %v199
      %v539 = vpop.permute.xlu0 %538
      %542 = vset.pattern.permute.xlu0 0
      %543 = vperm.xlu0 %542, %v200
      %v544 = vpop.permute.xlu0 %543
      %547 = vset.pattern.permute.xlu0 0
      %548 = vperm.xlu0 %547, %v201
      %v549 = vpop.permute.xlu0 %548
      %552 = vset.pattern.permute.xlu0 0
      %553 = vperm.xlu0 %552, %v202
      %v554 = vpop.permute.xlu0 %553
      %557 = vset.pattern.permute.xlu0 0
      %558 = vperm.xlu0 %557, %v203
      %v559 = vpop.permute.xlu0 %558
      %562 = vset.pattern.permute.xlu0 0
      %563 = vperm.xlu0 %562, %v204
      %v564 = vpop.permute.xlu0 %563
      %567 = vset.pattern.permute.xlu0 0
      %568 = vperm.xlu0 %567, %v205
      %v569 = vpop.permute.xlu0 %568
      %572 = vset.pattern.permute.xlu0 0
      %573 = vperm.xlu0 %572, %v206
      %v574 = vpop.permute.xlu0 %573
      %577 = vset.pattern.permute.xlu0 0
      %578 = vperm.xlu0 %577, %v207
      %v579 = vpop.permute.xlu0 %578
      %582 = vset.pattern.permute.xlu0 0
      %583 = vperm.xlu0 %582, %v208
      %v584 = vpop.permute.xlu0 %583
      %587 = vset.pattern.permute.xlu0 0
      %588 = vperm.xlu0 %587, %v209
      %v589 = vpop.permute.xlu0 %588
      %592 = vset.pattern.permute.xlu0 0
      %593 = vperm.xlu0 %592, %v210
      %v594 = vpop.permute.xlu0 %593
      %597 = vset.pattern.permute.xlu0 0
      %598 = vperm.xlu0 %597, %v211
      %v599 = vpop.permute.xlu0 %598
      %602 = vset.pattern.permute.xlu0 0
      %603 = vperm.xlu0 %602, %v212
      %v604 = vpop.permute.xlu0 %603
      %607 = vset.pattern.permute.xlu0 0
      %608 = vperm.xlu0 %607, %v213
      %v609 = vpop.permute.xlu0 %608
      %612 = vset.pattern.permute.xlu0 0
      %613 = vperm.xlu0 %612, %v214
      %v614 = vpop.permute.xlu0 %613
      %617 = vset.pattern.permute.xlu0 0
      %618 = vperm.xlu0 %617, %v215
      %v619 = vpop.permute.xlu0 %618
      %622 = vset.pattern.permute.xlu0 0
      %623 = vperm.xlu0 %622, %v216
      %v624 = vpop.permute.xlu0 %623
      %627 = vset.pattern.permute.xlu0 0
      %628 = vperm.xlu0 %627, %v217
      %v629 = vpop.permute.xlu0 %628
      %632 = vset.pattern.permute.xlu0 0
      %633 = vperm.xlu0 %632, %v218
      %v634 = vpop.permute.xlu0 %633
      %637 = vset.pattern.permute.xlu0 0
      %638 = vperm.xlu0 %637, %v219
      %v639 = vpop.permute.xlu0 %638
      %642 = vset.pattern.permute.xlu0 0
      %643 = vperm.xlu0 %642, %v220
      %v644 = vpop.permute.xlu0 %643
      %647 = vset.pattern.permute.xlu0 0
      %648 = vperm.xlu0 %647, %v221
      %v649 = vpop.permute.xlu0 %648
      %652 = vset.pattern.permute.xlu0 0
      %653 = vperm.xlu0 %652, %v222
      %v654 = vpop.permute.xlu0 %653
      %657 = vset.pattern.permute.xlu0 0
      %658 = vperm.xlu0 %657, %v223
      %v659 = vpop.permute.xlu0 %658
      %662 = vset.pattern.permute.xlu0 0
      %663 = vperm.xlu0 %662, %v224
      %v664 = vpop.permute.xlu0 %663
      %667 = vset.pattern.permute.xlu0 0
      %668 = vperm.xlu0 %667, %v225
      %v669 = vpop.permute.xlu0 %668
      %672 = vset.pattern.permute.xlu0 0
      %673 = vperm.xlu0 %672, %v226
      %v674 = vpop.permute.xlu0 %673
      %677 = vset.pattern.permute.xlu0 0
      %678 = vperm.xlu0 %677, %v227
      %v679 = vpop.permute.xlu0 %678
      %682 = vset.pattern.permute.xlu0 0
      %683 = vperm.xlu0 %682, %v228
      %v684 = vpop.permute.xlu0 %683
      %687 = vset.pattern.permute.xlu0 0
      %688 = vperm.xlu0 %687, %v229
      %v689 = vpop.permute.xlu0 %688
      %692 = vset.pattern.permute.xlu0 0
      %693 = vperm.xlu0 %692, %v230
      %v694 = vpop.permute.xlu0 %693
      %697 = vset.pattern.permute.xlu0 0
      %698 = vperm.xlu0 %697, %v231
      %v699 = vpop.permute.xlu0 %698
      %702 = vset.pattern.permute.xlu0 0
      %703 = vperm.xlu0 %702, %v232
      %v704 = vpop.permute.xlu0 %703
      %707 = vset.pattern.permute.xlu0 0
      %708 = vperm.xlu0 %707, %v233
      %v709 = vpop.permute.xlu0 %708
      %712 = vset.pattern.permute.xlu0 0
      %713 = vperm.xlu0 %712, %v234
      %v714 = vpop.permute.xlu0 %713
      %717 = vset.pattern.permute.xlu0 0
      %718 = vperm.xlu0 %717, %v235
      %v719 = vpop.permute.xlu0 %718
      %722 = vset.pattern.permute.xlu0 0
      %723 = vperm.xlu0 %722, %v236
      %v724 = vpop.permute.xlu0 %723
      %727 = vset.pattern.permute.xlu0 0
      %728 = vperm.xlu0 %727, %v237
      %v729 = vpop.permute.xlu0 %728
      %732 = vset.pattern.permute.xlu0 0
      %733 = vperm.xlu0 %732, %v238
      %v734 = vpop.permute.xlu0 %733
      %737 = vset.pattern.permute.xlu0 0
      %738 = vperm.xlu0 %737, %v239
      %v739 = vpop.permute.xlu0 %738
      %742 = vset.pattern.permute.xlu0 0
      %743 = vperm.xlu0 %742, %v240
      %v744 = vpop.permute.xlu0 %743
      %747 = vset.pattern.permute.xlu0 0
      %748 = vperm.xlu0 %747, %v241
      %v749 = vpop.permute.xlu0 %748
      %752 = vset.pattern.permute.xlu0 0
      %753 = vperm.xlu0 %752, %v242
      %v754 = vpop.permute.xlu0 %753
      %757 = vset.pattern.permute.xlu0 0
      %758 = vperm.xlu0 %757, %v243
      %v759 = vpop.permute.xlu0 %758
      %762 = vset.pattern.permute.xlu0 0
      %763 = vperm.xlu0 %762, %v244
      %v764 = vpop.permute.xlu0 %763
      %767 = vset.pattern.permute.xlu0 0
      %768 = vperm.xlu0 %767, %v245
      %v769 = vpop.permute.xlu0 %768
      %772 = vset.pattern.permute.xlu0 0
      %773 = vperm.xlu0 %772, %v246
      %v774 = vpop.permute.xlu0 %773
      %777 = vset.pattern.permute.xlu0 0
      %778 = vperm.xlu0 %777, %v247
      %v779 = vpop.permute.xlu0 %778
      %782 = vset.pattern.permute.xlu0 0
      %783 = vperm.xlu0 %782, %v248
      %v784 = vpop.permute.xlu0 %783
      %787 = vset.pattern.permute.xlu0 0
      %788 = vperm.xlu0 %787, %v249
      %v789 = vpop.permute.xlu0 %788
      %792 = vset.pattern.permute.xlu0 0
      %793 = vperm.xlu0 %792, %v250
      %v794 = vpop.permute.xlu0 %793
      %797 = vset.pattern.permute.xlu0 0
      %798 = vperm.xlu0 %797, %v251
      %v799 = vpop.permute.xlu0 %798
      %802 = vset.pattern.permute.xlu0 0
      %803 = vperm.xlu0 %802, %v252
      %v804 = vpop.permute.xlu0 %803
      %807 = vset.pattern.permute.xlu0 0
      %808 = vperm.xlu0 %807, %v253
      %v809 = vpop.permute.xlu0 %808
      %812 = vset.pattern.permute.xlu0 0
      %813 = vperm.xlu0 %812, %v254
      %v814 = vpop.permute.xlu0 %813
      %817 = vset.pattern.permute.xlu0 0
      %818 = vperm.xlu0 %817, %v255
      %v819 = vpop.permute.xlu0 %818
      %822 = vset.pattern.permute.xlu0 0
      %823 = vperm.xlu0 %822, %v256
      %v824 = vpop.permute.xlu0 %823
      %827 = vset.pattern.permute.xlu0 0
      %828 = vperm.xlu0 %827, %v257
      %v829 = vpop.permute.xlu0 %828
      %832 = vset.pattern.permute.xlu0 0
      %833 = vperm.xlu0 %832, %v258
      %v834 = vpop.permute.xlu0 %833
      %837 = vset.pattern.permute.xlu0 0
      %838 = vperm.xlu0 %837, %v259
      %v839 = vpop.permute.xlu0 %838
      %842 = vset.pattern.permute.xlu0 0
      %843 = vperm.xlu0 %842, %v260
      %v844 = vpop.permute.xlu0 %843
      %847 = vset.pattern.permute.xlu0 0
      %848 = vperm.xlu0 %847, %v261
      %v849 = vpop.permute.xlu0 %848
      %852 = vset.pattern.permute.xlu0 0
      %853 = vperm.xlu0 %852, %v262
      %v854 = vpop.permute.xlu0 %853
      %857 = vset.pattern.permute.xlu0 0
      %858 = vperm.xlu0 %857, %v263
      %v859 = vpop.permute.xlu0 %858
      %862 = vset.pattern.permute.xlu0 0
      %863 = vperm.xlu0 %862, %v264
      %v864 = vpop.permute.xlu0 %863
      %867 = vset.pattern.permute.xlu0 0
      %868 = vperm.xlu0 %867, %v265
      %v869 = vpop.permute.xlu0 %868
      %872 = vset.pattern.permute.xlu0 0
      %873 = vperm.xlu0 %872, %v266
      %v874 = vpop.permute.xlu0 %873
      %877 = vset.pattern.permute.xlu0 0
      %878 = vperm.xlu0 %877, %v267
      %v879 = vpop.permute.xlu0 %878
      %882 = vset.pattern.permute.xlu0 0
      %883 = vperm.xlu0 %882, %v268
      %v884 = vpop.permute.xlu0 %883
      %887 = vset.pattern.permute.xlu0 0
      %888 = vperm.xlu0 %887, %v269
      %v889 = vpop.permute.xlu0 %888
      %892 = vset.pattern.permute.xlu0 0
      %893 = vperm.xlu0 %892, %v270
      %v894 = vpop.permute.xlu0 %893
      %897 = vset.pattern.permute.xlu0 0
      %898 = vperm.xlu0 %897, %v271
      %v899 = vpop.permute.xlu0 %898
      %902 = vset.pattern.permute.xlu0 0
      %903 = vperm.xlu0 %902, %v272
      %v904 = vpop.permute.xlu0 %903
      %907 = vset.pattern.permute.xlu0 0
      %908 = vperm.xlu0 %907, %v273
      %v909 = vpop.permute.xlu0 %908
      %912 = vset.pattern.permute.xlu0 0
      %913 = vperm.xlu0 %912, %v274
      %v914 = vpop.permute.xlu0 %913
      %v916 = vlaneseq
      %v917 = vshrl.u32 %v916, 7
      %v918 = vsub.s32 0, %v917
      %v919 = vrot.slane %v275, %v918
      %v920 = vmul.f32 %v279, %v919
      %v921 = vmul.f32 %v284, %v919
      %v922 = vmul.f32 %v289, %v919
      %v923 = vmul.f32 %v294, %v919
      %v924 = vmul.f32 %v299, %v919
      %v925 = vmul.f32 %v304, %v919
      %v926 = vmul.f32 %v309, %v919
      %v927 = vmul.f32 %v314, %v919
      %v928 = vmul.f32 %v319, %v919
      %v929 = vmul.f32 %v324, %v919
      %v930 = vmul.f32 %v329, %v919
      %v931 = vmul.f32 %v334, %v919
      %v932 = vmul.f32 %v339, %v919
      %v933 = vmul.f32 %v344, %v919
      %v934 = vmul.f32 %v349, %v919
      %v935 = vmul.f32 %v354, %v919
      %v936 = vmul.f32 %v359, %v919
      %v937 = vmul.f32 %v364, %v919
      %v938 = vmul.f32 %v369, %v919
      %v939 = vmul.f32 %v374, %v919
      %v940 = vmul.f32 %v379, %v919
      %v941 = vmul.f32 %v384, %v919
      %v942 = vmul.f32 %v389, %v919
      %v943 = vmul.f32 %v394, %v919
      %v944 = vmul.f32 %v399, %v919
      %v945 = vmul.f32 %v404, %v919
      %v946 = vmul.f32 %v409, %v919
      %v947 = vmul.f32 %v414, %v919
      %v948 = vmul.f32 %v419, %v919
      %v949 = vmul.f32 %v424, %v919
      %v950 = vmul.f32 %v429, %v919
      %v951 = vmul.f32 %v434, %v919
      %v952 = vmul.f32 %v439, %v919
      %v953 = vmul.f32 %v444, %v919
      %v954 = vmul.f32 %v449, %v919
      %v955 = vmul.f32 %v454, %v919
      %v956 = vmul.f32 %v459, %v919
      %v957 = vmul.f32 %v464, %v919
      %v958 = vmul.f32 %v469, %v919
      %v959 = vmul.f32 %v474, %v919
      %v960 = vmul.f32 %v479, %v919
      %v961 = vmul.f32 %v484, %v919
      %v962 = vmul.f32 %v489, %v919
      %v963 = vmul.f32 %v494, %v919
      %v964 = vmul.f32 %v499, %v919
      %v965 = vmul.f32 %v504, %v919
      %v966 = vmul.f32 %v509, %v919
      %v967 = vmul.f32 %v514, %v919
      %v968 = vmul.f32 %v519, %v919
      %v969 = vmul.f32 %v524, %v919
      %v970 = vmul.f32 %v529, %v919
      %v971 = vmul.f32 %v534, %v919
      %v972 = vmul.f32 %v539, %v919
      %v973 = vmul.f32 %v544, %v919
      %v974 = vmul.f32 %v549, %v919
      %v975 = vmul.f32 %v554, %v919
      %v976 = vmul.f32 %v559, %v919
      %v977 = vmul.f32 %v564, %v919
      %v978 = vmul.f32 %v569, %v919
      %v979 = vmul.f32 %v574, %v919
      %v980 = vmul.f32 %v579, %v919
      %v981 = vmul.f32 %v584, %v919
      %v982 = vmul.f32 %v589, %v919
      %v983 = vmul.f32 %v594, %v919
      %v984 = vmul.f32 %v599, %v919
      %v985 = vmul.f32 %v604, %v919
      %v986 = vmul.f32 %v609, %v919
      %v987 = vmul.f32 %v614, %v919
      %v988 = vmul.f32 %v619, %v919
      %v989 = vmul.f32 %v624, %v919
      %v990 = vmul.f32 %v629, %v919
      %v991 = vmul.f32 %v634, %v919
      %v992 = vmul.f32 %v639, %v919
      %v993 = vmul.f32 %v644, %v919
      %v994 = vmul.f32 %v649, %v919
      %v995 = vmul.f32 %v654, %v919
      %v996 = vmul.f32 %v659, %v919
      %v997 = vmul.f32 %v664, %v919
      %v998 = vmul.f32 %v669, %v919
      %v999 = vmul.f32 %v674, %v919
      %v1000 = vmul.f32 %v679, %v919
      %v1001 = vmul.f32 %v684, %v919
      %v1002 = vmul.f32 %v689, %v919
      %v1003 = vmul.f32 %v694, %v919
      %v1004 = vmul.f32 %v699, %v919
      %v1005 = vmul.f32 %v704, %v919
      %v1006 = vmul.f32 %v709, %v919
      %v1007 = vmul.f32 %v714, %v919
      %v1008 = vmul.f32 %v719, %v919
      %v1009 = vmul.f32 %v724, %v919
      %v1010 = vmul.f32 %v729, %v919
      %v1011 = vmul.f32 %v734, %v919
      %v1012 = vmul.f32 %v739, %v919
      %v1013 = vmul.f32 %v744, %v919
      %v1014 = vmul.f32 %v749, %v919
      %v1015 = vmul.f32 %v754, %v919
      %v1016 = vmul.f32 %v759, %v919
      %v1017 = vmul.f32 %v764, %v919
      %v1018 = vmul.f32 %v769, %v919
      %v1019 = vmul.f32 %v774, %v919
      %v1020 = vmul.f32 %v779, %v919
      %v1021 = vmul.f32 %v784, %v919
      %v1022 = vmul.f32 %v789, %v919
      %v1023 = vmul.f32 %v794, %v919
      %v1024 = vmul.f32 %v799, %v919
      %v1025 = vmul.f32 %v804, %v919
      %v1026 = vmul.f32 %v809, %v919
      %v1027 = vmul.f32 %v814, %v919
      %v1028 = vmul.f32 %v819, %v919
      %v1029 = vmul.f32 %v824, %v919
      %v1030 = vmul.f32 %v829, %v919
      %v1031 = vmul.f32 %v834, %v919
      %v1032 = vmul.f32 %v839, %v919
      %v1033 = vmul.f32 %v844, %v919
      %v1034 = vmul.f32 %v849, %v919
      %v1035 = vmul.f32 %v854, %v919
      %v1036 = vmul.f32 %v859, %v919
      %v1037 = vmul.f32 %v864, %v919
      %v1038 = vmul.f32 %v869, %v919
      %v1039 = vmul.f32 %v874, %v919
      %v1040 = vmul.f32 %v879, %v919
      %v1041 = vmul.f32 %v884, %v919
      %v1042 = vmul.f32 %v889, %v919
      %v1043 = vmul.f32 %v894, %v919
      %v1044 = vmul.f32 %v899, %v919
      %v1045 = vmul.f32 %v904, %v919
      %v1046 = vmul.f32 %v909, %v919
      %v1047 = vmul.f32 %v914, %v919
      %1048 = vset.pattern.permute.xlu0 1
      %1049 = vperm.xlu0 %1048, %v147
      %v1050 = vpop.permute.xlu0 %1049
      %1052 = vset.pattern.permute.xlu0 1
      %1053 = vperm.xlu0 %1052, %v148
      %v1054 = vpop.permute.xlu0 %1053
      %1056 = vset.pattern.permute.xlu0 1
      %1057 = vperm.xlu0 %1056, %v149
      %v1058 = vpop.permute.xlu0 %1057
      %1060 = vset.pattern.permute.xlu0 1
      %1061 = vperm.xlu0 %1060, %v150
      %v1062 = vpop.permute.xlu0 %1061
      %1064 = vset.pattern.permute.xlu0 1
      %1065 = vperm.xlu0 %1064, %v151
      %v1066 = vpop.permute.xlu0 %1065
      %1068 = vset.pattern.permute.xlu0 1
      %1069 = vperm.xlu0 %1068, %v152
      %v1070 = vpop.permute.xlu0 %1069
      %1072 = vset.pattern.permute.xlu0 1
      %1073 = vperm.xlu0 %1072, %v153
      %v1074 = vpop.permute.xlu0 %1073
      %1076 = vset.pattern.permute.xlu0 1
      %1077 = vperm.xlu0 %1076, %v154
      %v1078 = vpop.permute.xlu0 %1077
      %1080 = vset.pattern.permute.xlu0 1
      %1081 = vperm.xlu0 %1080, %v155
      %v1082 = vpop.permute.xlu0 %1081
      %1084 = vset.pattern.permute.xlu0 1
      %1085 = vperm.xlu0 %1084, %v156
      %v1086 = vpop.permute.xlu0 %1085
      %1088 = vset.pattern.permute.xlu0 1
      %1089 = vperm.xlu0 %1088, %v157
      %v1090 = vpop.permute.xlu0 %1089
      %1092 = vset.pattern.permute.xlu0 1
      %1093 = vperm.xlu0 %1092, %v158
      %v1094 = vpop.permute.xlu0 %1093
      %1096 = vset.pattern.permute.xlu0 1
      %1097 = vperm.xlu0 %1096, %v159
      %v1098 = vpop.permute.xlu0 %1097
      %1100 = vset.pattern.permute.xlu0 1
      %1101 = vperm.xlu0 %1100, %v160
      %v1102 = vpop.permute.xlu0 %1101
      %1104 = vset.pattern.permute.xlu0 1
      %1105 = vperm.xlu0 %1104, %v161
      %v1106 = vpop.permute.xlu0 %1105
      %1108 = vset.pattern.permute.xlu0 1
      %1109 = vperm.xlu0 %1108, %v162
      %v1110 = vpop.permute.xlu0 %1109
      %1112 = vset.pattern.permute.xlu0 1
      %1113 = vperm.xlu0 %1112, %v163
      %v1114 = vpop.permute.xlu0 %1113
      %1116 = vset.pattern.permute.xlu0 1
      %1117 = vperm.xlu0 %1116, %v164
      %v1118 = vpop.permute.xlu0 %1117
      %1120 = vset.pattern.permute.xlu0 1
      %1121 = vperm.xlu0 %1120, %v165
      %v1122 = vpop.permute.xlu0 %1121
      %1124 = vset.pattern.permute.xlu0 1
      %1125 = vperm.xlu0 %1124, %v166
      %v1126 = vpop.permute.xlu0 %1125
      %1128 = vset.pattern.permute.xlu0 1
      %1129 = vperm.xlu0 %1128, %v167
      %v1130 = vpop.permute.xlu0 %1129
      %1132 = vset.pattern.permute.xlu0 1
      %1133 = vperm.xlu0 %1132, %v168
      %v1134 = vpop.permute.xlu0 %1133
      %1136 = vset.pattern.permute.xlu0 1
      %1137 = vperm.xlu0 %1136, %v169
      %v1138 = vpop.permute.xlu0 %1137
      %1140 = vset.pattern.permute.xlu0 1
      %1141 = vperm.xlu0 %1140, %v170
      %v1142 = vpop.permute.xlu0 %1141
      %1144 = vset.pattern.permute.xlu0 1
      %1145 = vperm.xlu0 %1144, %v171
      %v1146 = vpop.permute.xlu0 %1145
      %1148 = vset.pattern.permute.xlu0 1
      %1149 = vperm.xlu0 %1148, %v172
      %v1150 = vpop.permute.xlu0 %1149
      %1152 = vset.pattern.permute.xlu0 1
      %1153 = vperm.xlu0 %1152, %v173
      %v1154 = vpop.permute.xlu0 %1153
      %1156 = vset.pattern.permute.xlu0 1
      %1157 = vperm.xlu0 %1156, %v174
      %v1158 = vpop.permute.xlu0 %1157
      %1160 = vset.pattern.permute.xlu0 1
      %1161 = vperm.xlu0 %1160, %v175
      %v1162 = vpop.permute.xlu0 %1161
      %1164 = vset.pattern.permute.xlu0 1
      %1165 = vperm.xlu0 %1164, %v176
      %v1166 = vpop.permute.xlu0 %1165
      %1168 = vset.pattern.permute.xlu0 1
      %1169 = vperm.xlu0 %1168, %v177
      %v1170 = vpop.permute.xlu0 %1169
      %1172 = vset.pattern.permute.xlu0 1
      %1173 = vperm.xlu0 %1172, %v178
      %v1174 = vpop.permute.xlu0 %1173
      %1176 = vset.pattern.permute.xlu0 1
      %1177 = vperm.xlu0 %1176, %v179
      %v1178 = vpop.permute.xlu0 %1177
      %1180 = vset.pattern.permute.xlu0 1
      %1181 = vperm.xlu0 %1180, %v180
      %v1182 = vpop.permute.xlu0 %1181
      %1184 = vset.pattern.permute.xlu0 1
      %1185 = vperm.xlu0 %1184, %v181
      %v1186 = vpop.permute.xlu0 %1185
      %1188 = vset.pattern.permute.xlu0 1
      %1189 = vperm.xlu0 %1188, %v182
      %v1190 = vpop.permute.xlu0 %1189
      %1192 = vset.pattern.permute.xlu0 1
      %1193 = vperm.xlu0 %1192, %v183
      %v1194 = vpop.permute.xlu0 %1193
      %1196 = vset.pattern.permute.xlu0 1
      %1197 = vperm.xlu0 %1196, %v184
      %v1198 = vpop.permute.xlu0 %1197
      %1200 = vset.pattern.permute.xlu0 1
      %1201 = vperm.xlu0 %1200, %v185
      %v1202 = vpop.permute.xlu0 %1201
      %1204 = vset.pattern.permute.xlu0 1
      %1205 = vperm.xlu0 %1204, %v186
      %v1206 = vpop.permute.xlu0 %1205
      %1208 = vset.pattern.permute.xlu0 1
      %1209 = vperm.xlu0 %1208, %v187
      %v1210 = vpop.permute.xlu0 %1209
      %1212 = vset.pattern.permute.xlu0 1
      %1213 = vperm.xlu0 %1212, %v188
      %v1214 = vpop.permute.xlu0 %1213
      %1216 = vset.pattern.permute.xlu0 1
      %1217 = vperm.xlu0 %1216, %v189
      %v1218 = vpop.permute.xlu0 %1217
      %1220 = vset.pattern.permute.xlu0 1
      %1221 = vperm.xlu0 %1220, %v190
      %v1222 = vpop.permute.xlu0 %1221
      %1224 = vset.pattern.permute.xlu0 1
      %1225 = vperm.xlu0 %1224, %v191
      %v1226 = vpop.permute.xlu0 %1225
      %1228 = vset.pattern.permute.xlu0 1
      %1229 = vperm.xlu0 %1228, %v192
      %v1230 = vpop.permute.xlu0 %1229
      %1232 = vset.pattern.permute.xlu0 1
      %1233 = vperm.xlu0 %1232, %v193
      %v1234 = vpop.permute.xlu0 %1233
      %1236 = vset.pattern.permute.xlu0 1
      %1237 = vperm.xlu0 %1236, %v194
      %v1238 = vpop.permute.xlu0 %1237
      %1240 = vset.pattern.permute.xlu0 1
      %1241 = vperm.xlu0 %1240, %v195
      %v1242 = vpop.permute.xlu0 %1241
      %1244 = vset.pattern.permute.xlu0 1
      %1245 = vperm.xlu0 %1244, %v196
      %v1246 = vpop.permute.xlu0 %1245
      %1248 = vset.pattern.permute.xlu0 1
      %1249 = vperm.xlu0 %1248, %v197
      %v1250 = vpop.permute.xlu0 %1249
      %1252 = vset.pattern.permute.xlu0 1
      %1253 = vperm.xlu0 %1252, %v198
      %v1254 = vpop.permute.xlu0 %1253
      %1256 = vset.pattern.permute.xlu0 1
      %1257 = vperm.xlu0 %1256, %v199
      %v1258 = vpop.permute.xlu0 %1257
      %1260 = vset.pattern.permute.xlu0 1
      %1261 = vperm.xlu0 %1260, %v200
      %v1262 = vpop.permute.xlu0 %1261
      %1264 = vset.pattern.permute.xlu0 1
      %1265 = vperm.xlu0 %1264, %v201
      %v1266 = vpop.permute.xlu0 %1265
      %1268 = vset.pattern.permute.xlu0 1
      %1269 = vperm.xlu0 %1268, %v202
      %v1270 = vpop.permute.xlu0 %1269
      %1272 = vset.pattern.permute.xlu0 1
      %1273 = vperm.xlu0 %1272, %v203
      %v1274 = vpop.permute.xlu0 %1273
      %1276 = vset.pattern.permute.xlu0 1
      %1277 = vperm.xlu0 %1276, %v204
      %v1278 = vpop.permute.xlu0 %1277
      %1280 = vset.pattern.permute.xlu0 1
      %1281 = vperm.xlu0 %1280, %v205
      %v1282 = vpop.permute.xlu0 %1281
      %1284 = vset.pattern.permute.xlu0 1
      %1285 = vperm.xlu0 %1284, %v206
      %v1286 = vpop.permute.xlu0 %1285
      %1288 = vset.pattern.permute.xlu0 1
      %1289 = vperm.xlu0 %1288, %v207
      %v1290 = vpop.permute.xlu0 %1289
      %1292 = vset.pattern.permute.xlu0 1
      %1293 = vperm.xlu0 %1292, %v208
      %v1294 = vpop.permute.xlu0 %1293
      %1296 = vset.pattern.permute.xlu0 1
      %1297 = vperm.xlu0 %1296, %v209
      %v1298 = vpop.permute.xlu0 %1297
      %1300 = vset.pattern.permute.xlu0 1
      %1301 = vperm.xlu0 %1300, %v210
      %v1302 = vpop.permute.xlu0 %1301
      %1304 = vset.pattern.permute.xlu0 1
      %1305 = vperm.xlu0 %1304, %v211
      %v1306 = vpop.permute.xlu0 %1305
      %1308 = vset.pattern.permute.xlu0 1
      %1309 = vperm.xlu0 %1308, %v212
      %v1310 = vpop.permute.xlu0 %1309
      %1312 = vset.pattern.permute.xlu0 1
      %1313 = vperm.xlu0 %1312, %v213
      %v1314 = vpop.permute.xlu0 %1313
      %1316 = vset.pattern.permute.xlu0 1
      %1317 = vperm.xlu0 %1316, %v214
      %v1318 = vpop.permute.xlu0 %1317
      %1320 = vset.pattern.permute.xlu0 1
      %1321 = vperm.xlu0 %1320, %v215
      %v1322 = vpop.permute.xlu0 %1321
      %1324 = vset.pattern.permute.xlu0 1
      %1325 = vperm.xlu0 %1324, %v216
      %v1326 = vpop.permute.xlu0 %1325
      %1328 = vset.pattern.permute.xlu0 1
      %1329 = vperm.xlu0 %1328, %v217
      %v1330 = vpop.permute.xlu0 %1329
      %1332 = vset.pattern.permute.xlu0 1
      %1333 = vperm.xlu0 %1332, %v218
      %v1334 = vpop.permute.xlu0 %1333
      %1336 = vset.pattern.permute.xlu0 1
      %1337 = vperm.xlu0 %1336, %v219
      %v1338 = vpop.permute.xlu0 %1337
      %1340 = vset.pattern.permute.xlu0 1
      %1341 = vperm.xlu0 %1340, %v220
      %v1342 = vpop.permute.xlu0 %1341
      %1344 = vset.pattern.permute.xlu0 1
      %1345 = vperm.xlu0 %1344, %v221
      %v1346 = vpop.permute.xlu0 %1345
      %1348 = vset.pattern.permute.xlu0 1
      %1349 = vperm.xlu0 %1348, %v222
      %v1350 = vpop.permute.xlu0 %1349
      %1352 = vset.pattern.permute.xlu0 1
      %1353 = vperm.xlu0 %1352, %v223
      %v1354 = vpop.permute.xlu0 %1353
      %1356 = vset.pattern.permute.xlu0 1
      %1357 = vperm.xlu0 %1356, %v224
      %v1358 = vpop.permute.xlu0 %1357
      %1360 = vset.pattern.permute.xlu0 1
      %1361 = vperm.xlu0 %1360, %v225
      %v1362 = vpop.permute.xlu0 %1361
      %1364 = vset.pattern.permute.xlu0 1
      %1365 = vperm.xlu0 %1364, %v226
      %v1366 = vpop.permute.xlu0 %1365
      %1368 = vset.pattern.permute.xlu0 1
      %1369 = vperm.xlu0 %1368, %v227
      %v1370 = vpop.permute.xlu0 %1369
      %1372 = vset.pattern.permute.xlu0 1
      %1373 = vperm.xlu0 %1372, %v228
      %v1374 = vpop.permute.xlu0 %1373
      %1376 = vset.pattern.permute.xlu0 1
      %1377 = vperm.xlu0 %1376, %v229
      %v1378 = vpop.permute.xlu0 %1377
      %1380 = vset.pattern.permute.xlu0 1
      %1381 = vperm.xlu0 %1380, %v230
      %v1382 = vpop.permute.xlu0 %1381
      %1384 = vset.pattern.permute.xlu0 1
      %1385 = vperm.xlu0 %1384, %v231
      %v1386 = vpop.permute.xlu0 %1385
      %1388 = vset.pattern.permute.xlu0 1
      %1389 = vperm.xlu0 %1388, %v232
      %v1390 = vpop.permute.xlu0 %1389
      %1392 = vset.pattern.permute.xlu0 1
      %1393 = vperm.xlu0 %1392, %v233
      %v1394 = vpop.permute.xlu0 %1393
      %1396 = vset.pattern.permute.xlu0 1
      %1397 = vperm.xlu0 %1396, %v234
      %v1398 = vpop.permute.xlu0 %1397
      %1400 = vset.pattern.permute.xlu0 1
      %1401 = vperm.xlu0 %1400, %v235
      %v1402 = vpop.permute.xlu0 %1401
      %1404 = vset.pattern.permute.xlu0 1
      %1405 = vperm.xlu0 %1404, %v236
      %v1406 = vpop.permute.xlu0 %1405
      %1408 = vset.pattern.permute.xlu0 1
      %1409 = vperm.xlu0 %1408, %v237
      %v1410 = vpop.permute.xlu0 %1409
      %1412 = vset.pattern.permute.xlu0 1
      %1413 = vperm.xlu0 %1412, %v238
      %v1414 = vpop.permute.xlu0 %1413
      %1416 = vset.pattern.permute.xlu0 1
      %1417 = vperm.xlu0 %1416, %v239
      %v1418 = vpop.permute.xlu0 %1417
      %1420 = vset.pattern.permute.xlu0 1
      %1421 = vperm.xlu0 %1420, %v240
      %v1422 = vpop.permute.xlu0 %1421
      %1424 = vset.pattern.permute.xlu0 1
      %1425 = vperm.xlu0 %1424, %v241
      %v1426 = vpop.permute.xlu0 %1425
      %1428 = vset.pattern.permute.xlu0 1
      %1429 = vperm.xlu0 %1428, %v242
      %v1430 = vpop.permute.xlu0 %1429
      %1432 = vset.pattern.permute.xlu0 1
      %1433 = vperm.xlu0 %1432, %v243
      %v1434 = vpop.permute.xlu0 %1433
      %1436 = vset.pattern.permute.xlu0 1
      %1437 = vperm.xlu0 %1436, %v244
      %v1438 = vpop.permute.xlu0 %1437
      %1440 = vset.pattern.permute.xlu0 1
      %1441 = vperm.xlu0 %1440, %v245
      %v1442 = vpop.permute.xlu0 %1441
      %1444 = vset.pattern.permute.xlu0 1
      %1445 = vperm.xlu0 %1444, %v246
      %v1446 = vpop.permute.xlu0 %1445
      %1448 = vset.pattern.permute.xlu0 1
      %1449 = vperm.xlu0 %1448, %v247
      %v1450 = vpop.permute.xlu0 %1449
      %1452 = vset.pattern.permute.xlu0 1
      %1453 = vperm.xlu0 %1452, %v248
      %v1454 = vpop.permute.xlu0 %1453
      %1456 = vset.pattern.permute.xlu0 1
      %1457 = vperm.xlu0 %1456, %v249
      %v1458 = vpop.permute.xlu0 %1457
      %1460 = vset.pattern.permute.xlu0 1
      %1461 = vperm.xlu0 %1460, %v250
      %v1462 = vpop.permute.xlu0 %1461
      %1464 = vset.pattern.permute.xlu0 1
      %1465 = vperm.xlu0 %1464, %v251
      %v1466 = vpop.permute.xlu0 %1465
      %1468 = vset.pattern.permute.xlu0 1
      %1469 = vperm.xlu0 %1468, %v252
      %v1470 = vpop.permute.xlu0 %1469
      %1472 = vset.pattern.permute.xlu0 1
      %1473 = vperm.xlu0 %1472, %v253
      %v1474 = vpop.permute.xlu0 %1473
      %1476 = vset.pattern.permute.xlu0 1
      %1477 = vperm.xlu0 %1476, %v254
      %v1478 = vpop.permute.xlu0 %1477
      %1480 = vset.pattern.permute.xlu0 1
      %1481 = vperm.xlu0 %1480, %v255
      %v1482 = vpop.permute.xlu0 %1481
      %1484 = vset.pattern.permute.xlu0 1
      %1485 = vperm.xlu0 %1484, %v256
      %v1486 = vpop.permute.xlu0 %1485
      %1488 = vset.pattern.permute.xlu0 1
      %1489 = vperm.xlu0 %1488, %v257
      %v1490 = vpop.permute.xlu0 %1489
      %1492 = vset.pattern.permute.xlu0 1
      %1493 = vperm.xlu0 %1492, %v258
      %v1494 = vpop.permute.xlu0 %1493
      %1496 = vset.pattern.permute.xlu0 1
      %1497 = vperm.xlu0 %1496, %v259
      %v1498 = vpop.permute.xlu0 %1497
      %1500 = vset.pattern.permute.xlu0 1
      %1501 = vperm.xlu0 %1500, %v260
      %v1502 = vpop.permute.xlu0 %1501
      %1504 = vset.pattern.permute.xlu0 1
      %1505 = vperm.xlu0 %1504, %v261
      %v1506 = vpop.permute.xlu0 %1505
      %1508 = vset.pattern.permute.xlu0 1
      %1509 = vperm.xlu0 %1508, %v262
      %v1510 = vpop.permute.xlu0 %1509
      %1512 = vset.pattern.permute.xlu0 1
      %1513 = vperm.xlu0 %1512, %v263
      %v1514 = vpop.permute.xlu0 %1513
      %1516 = vset.pattern.permute.xlu0 1
      %1517 = vperm.xlu0 %1516, %v264
      %v1518 = vpop.permute.xlu0 %1517
      %1520 = vset.pattern.permute.xlu0 1
      %1521 = vperm.xlu0 %1520, %v265
      %v1522 = vpop.permute.xlu0 %1521
      %1524 = vset.pattern.permute.xlu0 1
      %1525 = vperm.xlu0 %1524, %v266
      %v1526 = vpop.permute.xlu0 %1525
      %1528 = vset.pattern.permute.xlu0 1
      %1529 = vperm.xlu0 %1528, %v267
      %v1530 = vpop.permute.xlu0 %1529
      %1532 = vset.pattern.permute.xlu0 1
      %1533 = vperm.xlu0 %1532, %v268
      %v1534 = vpop.permute.xlu0 %1533
      %1536 = vset.pattern.permute.xlu0 1
      %1537 = vperm.xlu0 %1536, %v269
      %v1538 = vpop.permute.xlu0 %1537
      %1540 = vset.pattern.permute.xlu0 1
      %1541 = vperm.xlu0 %1540, %v270
      %v1542 = vpop.permute.xlu0 %1541
      %1544 = vset.pattern.permute.xlu0 1
      %1545 = vperm.xlu0 %1544, %v271
      %v1546 = vpop.permute.xlu0 %1545
      %1548 = vset.pattern.permute.xlu0 1
      %1549 = vperm.xlu0 %1548, %v272
      %v1550 = vpop.permute.xlu0 %1549
      %1552 = vset.pattern.permute.xlu0 1
      %1553 = vperm.xlu0 %1552, %v273
      %v1554 = vpop.permute.xlu0 %1553
      %1556 = vset.pattern.permute.xlu0 1
      %1557 = vperm.xlu0 %1556, %v274
      %v1558 = vpop.permute.xlu0 %1557
      %v1560 = vlaneseq
      %v1561 = vshrl.u32 %v1560, 7
      %v1562 = vsub.s32 1, %v1561
      %v1563 = vrot.slane %v275, %v1562
      %v1564 = vmul.f32 %v1050, %v1563
      %v1565 = vmul.f32 %v1054, %v1563
      %v1566 = vmul.f32 %v1058, %v1563
      %v1567 = vmul.f32 %v1062, %v1563
      %v1568 = vmul.f32 %v1066, %v1563
      %v1569 = vmul.f32 %v1070, %v1563
      %v1570 = vmul.f32 %v1074, %v1563
      %v1571 = vmul.f32 %v1078, %v1563
      %v1572 = vmul.f32 %v1082, %v1563
      %v1573 = vmul.f32 %v1086, %v1563
      %v1574 = vmul.f32 %v1090, %v1563
      %v1575 = vmul.f32 %v1094, %v1563
      %v1576 = vmul.f32 %v1098, %v1563
      %v1577 = vmul.f32 %v1102, %v1563
      %v1578 = vmul.f32 %v1106, %v1563
      %v1579 = vmul.f32 %v1110, %v1563
      %v1580 = vmul.f32 %v1114, %v1563
      %v1581 = vmul.f32 %v1118, %v1563
      %v1582 = vmul.f32 %v1122, %v1563
      %v1583 = vmul.f32 %v1126, %v1563
      %v1584 = vmul.f32 %v1130, %v1563
      %v1585 = vmul.f32 %v1134, %v1563
      %v1586 = vmul.f32 %v1138, %v1563
      %v1587 = vmul.f32 %v1142, %v1563
      %v1588 = vmul.f32 %v1146, %v1563
      %v1589 = vmul.f32 %v1150, %v1563
      %v1590 = vmul.f32 %v1154, %v1563
      %v1591 = vmul.f32 %v1158, %v1563
      %v1592 = vmul.f32 %v1162, %v1563
      %v1593 = vmul.f32 %v1166, %v1563
      %v1594 = vmul.f32 %v1170, %v1563
      %v1595 = vmul.f32 %v1174, %v1563
      %v1596 = vmul.f32 %v1178, %v1563
      %v1597 = vmul.f32 %v1182, %v1563
      %v1598 = vmul.f32 %v1186, %v1563
      %v1599 = vmul.f32 %v1190, %v1563
      %v1600 = vmul.f32 %v1194, %v1563
      %v1601 = vmul.f32 %v1198, %v1563
      %v1602 = vmul.f32 %v1202, %v1563
      %v1603 = vmul.f32 %v1206, %v1563
      %v1604 = vmul.f32 %v1210, %v1563
      %v1605 = vmul.f32 %v1214, %v1563
      %v1606 = vmul.f32 %v1218, %v1563
      %v1607 = vmul.f32 %v1222, %v1563
      %v1608 = vmul.f32 %v1226, %v1563
      %v1609 = vmul.f32 %v1230, %v1563
      %v1610 = vmul.f32 %v1234, %v1563
      %v1611 = vmul.f32 %v1238, %v1563
      %v1612 = vmul.f32 %v1242, %v1563
      %v1613 = vmul.f32 %v1246, %v1563
      %v1614 = vmul.f32 %v1250, %v1563
      %v1615 = vmul.f32 %v1254, %v1563
      %v1616 = vmul.f32 %v1258, %v1563
      %v1617 = vmul.f32 %v1262, %v1563
      %v1618 = vmul.f32 %v1266, %v1563
      %v1619 = vmul.f32 %v1270, %v1563
      %v1620 = vmul.f32 %v1274, %v1563
      %v1621 = vmul.f32 %v1278, %v1563
      %v1622 = vmul.f32 %v1282, %v1563
      %v1623 = vmul.f32 %v1286, %v1563
      %v1624 = vmul.f32 %v1290, %v1563
      %v1625 = vmul.f32 %v1294, %v1563
      %v1626 = vmul.f32 %v1298, %v1563
      %v1627 = vmul.f32 %v1302, %v1563
      %v1628 = vmul.f32 %v1306, %v1563
      %v1629 = vmul.f32 %v1310, %v1563
      %v1630 = vmul.f32 %v1314, %v1563
      %v1631 = vmul.f32 %v1318, %v1563
      %v1632 = vmul.f32 %v1322, %v1563
      %v1633 = vmul.f32 %v1326, %v1563
      %v1634 = vmul.f32 %v1330, %v1563
      %v1635 = vmul.f32 %v1334, %v1563
      %v1636 = vmul.f32 %v1338, %v1563
      %v1637 = vmul.f32 %v1342, %v1563
      %v1638 = vmul.f32 %v1346, %v1563
      %v1639 = vmul.f32 %v1350, %v1563
      %v1640 = vmul.f32 %v1354, %v1563
      %v1641 = vmul.f32 %v1358, %v1563
      %v1642 = vmul.f32 %v1362, %v1563
      %v1643 = vmul.f32 %v1366, %v1563
      %v1644 = vmul.f32 %v1370, %v1563
      %v1645 = vmul.f32 %v1374, %v1563
      %v1646 = vmul.f32 %v1378, %v1563
      %v1647 = vmul.f32 %v1382, %v1563
      %v1648 = vmul.f32 %v1386, %v1563
      %v1649 = vmul.f32 %v1390, %v1563
      %v1650 = vmul.f32 %v1394, %v1563
      %v1651 = vmul.f32 %v1398, %v1563
      %v1652 = vmul.f32 %v1402, %v1563
      %v1653 = vmul.f32 %v1406, %v1563
      %v1654 = vmul.f32 %v1410, %v1563
      %v1655 = vmul.f32 %v1414, %v1563
      %v1656 = vmul.f32 %v1418, %v1563
      %v1657 = vmul.f32 %v1422, %v1563
      %v1658 = vmul.f32 %v1426, %v1563
      %v1659 = vmul.f32 %v1430, %v1563
      %v1660 = vmul.f32 %v1434, %v1563
      %v1661 = vmul.f32 %v1438, %v1563
      %v1662 = vmul.f32 %v1442, %v1563
      %v1663 = vmul.f32 %v1446, %v1563
      %v1664 = vmul.f32 %v1450, %v1563
      %v1665 = vmul.f32 %v1454, %v1563
      %v1666 = vmul.f32 %v1458, %v1563
      %v1667 = vmul.f32 %v1462, %v1563
      %v1668 = vmul.f32 %v1466, %v1563
      %v1669 = vmul.f32 %v1470, %v1563
      %v1670 = vmul.f32 %v1474, %v1563
      %v1671 = vmul.f32 %v1478, %v1563
      %v1672 = vmul.f32 %v1482, %v1563
      %v1673 = vmul.f32 %v1486, %v1563
      %v1674 = vmul.f32 %v1490, %v1563
      %v1675 = vmul.f32 %v1494, %v1563
      %v1676 = vmul.f32 %v1498, %v1563
      %v1677 = vmul.f32 %v1502, %v1563
      %v1678 = vmul.f32 %v1506, %v1563
      %v1679 = vmul.f32 %v1510, %v1563
      %v1680 = vmul.f32 %v1514, %v1563
      %v1681 = vmul.f32 %v1518, %v1563
      %v1682 = vmul.f32 %v1522, %v1563
      %v1683 = vmul.f32 %v1526, %v1563
      %v1684 = vmul.f32 %v1530, %v1563
      %v1685 = vmul.f32 %v1534, %v1563
      %v1686 = vmul.f32 %v1538, %v1563
      %v1687 = vmul.f32 %v1542, %v1563
      %v1688 = vmul.f32 %v1546, %v1563
      %v1689 = vmul.f32 %v1550, %v1563
      %v1690 = vmul.f32 %v1554, %v1563
      %v1691 = vmul.f32 %v1558, %v1563
      %v1692 = vadd.f32 %v920, %v1564
      %v1693 = vadd.f32 %v921, %v1565
      %v1694 = vadd.f32 %v922, %v1566
      %v1695 = vadd.f32 %v923, %v1567
      %v1696 = vadd.f32 %v924, %v1568
      %v1697 = vadd.f32 %v925, %v1569
      %v1698 = vadd.f32 %v926, %v1570
      %v1699 = vadd.f32 %v927, %v1571
      %v1700 = vadd.f32 %v928, %v1572
      %v1701 = vadd.f32 %v929, %v1573
      %v1702 = vadd.f32 %v930, %v1574
      %v1703 = vadd.f32 %v931, %v1575
      %v1704 = vadd.f32 %v932, %v1576
      %v1705 = vadd.f32 %v933, %v1577
      %v1706 = vadd.f32 %v934, %v1578
      %v1707 = vadd.f32 %v935, %v1579
      %v1708 = vadd.f32 %v936, %v1580
      %v1709 = vadd.f32 %v937, %v1581
      %v1710 = vadd.f32 %v938, %v1582
      %v1711 = vadd.f32 %v939, %v1583
      %v1712 = vadd.f32 %v940, %v1584
      %v1713 = vadd.f32 %v941, %v1585
      %v1714 = vadd.f32 %v942, %v1586
      %v1715 = vadd.f32 %v943, %v1587
      %v1716 = vadd.f32 %v944, %v1588
      %v1717 = vadd.f32 %v945, %v1589
      %v1718 = vadd.f32 %v946, %v1590
      %v1719 = vadd.f32 %v947, %v1591
      %v1720 = vadd.f32 %v948, %v1592
      %v1721 = vadd.f32 %v949, %v1593
      %v1722 = vadd.f32 %v950, %v1594
      %v1723 = vadd.f32 %v951, %v1595
      %v1724 = vadd.f32 %v952, %v1596
      %v1725 = vadd.f32 %v953, %v1597
      %v1726 = vadd.f32 %v954, %v1598
      %v1727 = vadd.f32 %v955, %v1599
      %v1728 = vadd.f32 %v956, %v1600
      %v1729 = vadd.f32 %v957, %v1601
      %v1730 = vadd.f32 %v958, %v1602
      %v1731 = vadd.f32 %v959, %v1603
      %v1732 = vadd.f32 %v960, %v1604
      %v1733 = vadd.f32 %v961, %v1605
      %v1734 = vadd.f32 %v962, %v1606
      %v1735 = vadd.f32 %v963, %v1607
      %v1736 = vadd.f32 %v964, %v1608
      %v1737 = vadd.f32 %v965, %v1609
      %v1738 = vadd.f32 %v966, %v1610
      %v1739 = vadd.f32 %v967, %v1611
      %v1740 = vadd.f32 %v968, %v1612
      %v1741 = vadd.f32 %v969, %v1613
      %v1742 = vadd.f32 %v970, %v1614
      %v1743 = vadd.f32 %v971, %v1615
      %v1744 = vadd.f32 %v972, %v1616
      %v1745 = vadd.f32 %v973, %v1617
      %v1746 = vadd.f32 %v974, %v1618
      %v1747 = vadd.f32 %v975, %v1619
      %v1748 = vadd.f32 %v976, %v1620
      %v1749 = vadd.f32 %v977, %v1621
      %v1750 = vadd.f32 %v978, %v1622
      %v1751 = vadd.f32 %v979, %v1623
      %v1752 = vadd.f32 %v980, %v1624
      %v1753 = vadd.f32 %v981, %v1625
      %v1754 = vadd.f32 %v982, %v1626
      %v1755 = vadd.f32 %v983, %v1627
      %v1756 = vadd.f32 %v984, %v1628
      %v1757 = vadd.f32 %v985, %v1629
      %v1758 = vadd.f32 %v986, %v1630
      %v1759 = vadd.f32 %v987, %v1631
      %v1760 = vadd.f32 %v988, %v1632
      %v1761 = vadd.f32 %v989, %v1633
      %v1762 = vadd.f32 %v990, %v1634
      %v1763 = vadd.f32 %v991, %v1635
      %v1764 = vadd.f32 %v992, %v1636
      %v1765 = vadd.f32 %v993, %v1637
      %v1766 = vadd.f32 %v994, %v1638
      %v1767 = vadd.f32 %v995, %v1639
      %v1768 = vadd.f32 %v996, %v1640
      %v1769 = vadd.f32 %v997, %v1641
      %v1770 = vadd.f32 %v998, %v1642
      %v1771 = vadd.f32 %v999, %v1643
      %v1772 = vadd.f32 %v1000, %v1644
      %v1773 = vadd.f32 %v1001, %v1645
      %v1774 = vadd.f32 %v1002, %v1646
      %v1775 = vadd.f32 %v1003, %v1647
      %v1776 = vadd.f32 %v1004, %v1648
      %v1777 = vadd.f32 %v1005, %v1649
      %v1778 = vadd.f32 %v1006, %v1650
      %v1779 = vadd.f32 %v1007, %v1651
      %v1780 = vadd.f32 %v1008, %v1652
      %v1781 = vadd.f32 %v1009, %v1653
      %v1782 = vadd.f32 %v1010, %v1654
      %v1783 = vadd.f32 %v1011, %v1655
      %v1784 = vadd.f32 %v1012, %v1656
      %v1785 = vadd.f32 %v1013, %v1657
      %v1786 = vadd.f32 %v1014, %v1658
      %v1787 = vadd.f32 %v1015, %v1659
      %v1788 = vadd.f32 %v1016, %v1660
      %v1789 = vadd.f32 %v1017, %v1661
      %v1790 = vadd.f32 %v1018, %v1662
      %v1791 = vadd.f32 %v1019, %v1663
      %v1792 = vadd.f32 %v1020, %v1664
      %v1793 = vadd.f32 %v1021, %v1665
      %v1794 = vadd.f32 %v1022, %v1666
      %v1795 = vadd.f32 %v1023, %v1667
      %v1796 = vadd.f32 %v1024, %v1668
      %v1797 = vadd.f32 %v1025, %v1669
      %v1798 = vadd.f32 %v1026, %v1670
      %v1799 = vadd.f32 %v1027, %v1671
      %v1800 = vadd.f32 %v1028, %v1672
      %v1801 = vadd.f32 %v1029, %v1673
      %v1802 = vadd.f32 %v1030, %v1674
      %v1803 = vadd.f32 %v1031, %v1675
      %v1804 = vadd.f32 %v1032, %v1676
      %v1805 = vadd.f32 %v1033, %v1677
      %v1806 = vadd.f32 %v1034, %v1678
      %v1807 = vadd.f32 %v1035, %v1679
      %v1808 = vadd.f32 %v1036, %v1680
      %v1809 = vadd.f32 %v1037, %v1681
      %v1810 = vadd.f32 %v1038, %v1682
      %v1811 = vadd.f32 %v1039, %v1683
      %v1812 = vadd.f32 %v1040, %v1684
      %v1813 = vadd.f32 %v1041, %v1685
      %v1814 = vadd.f32 %v1042, %v1686
      %v1815 = vadd.f32 %v1043, %v1687
      %v1816 = vadd.f32 %v1044, %v1688
      %v1817 = vadd.f32 %v1045, %v1689
      %v1818 = vadd.f32 %v1046, %v1690
      %v1819 = vadd.f32 %v1047, %v1691
      %1820 = vset.pattern.permute.xlu0 2
      %1821 = vperm.xlu0 %1820, %v147
      %v1822 = vpop.permute.xlu0 %1821
      %1824 = vset.pattern.permute.xlu0 2
      %1825 = vperm.xlu0 %1824, %v148
      %v1826 = vpop.permute.xlu0 %1825
      %1828 = vset.pattern.permute.xlu0 2
      %1829 = vperm.xlu0 %1828, %v149
      %v1830 = vpop.permute.xlu0 %1829
      %1832 = vset.pattern.permute.xlu0 2
      %1833 = vperm.xlu0 %1832, %v150
      %v1834 = vpop.permute.xlu0 %1833
      %1836 = vset.pattern.permute.xlu0 2
      %1837 = vperm.xlu0 %1836, %v151
      %v1838 = vpop.permute.xlu0 %1837
      %1840 = vset.pattern.permute.xlu0 2
      %1841 = vperm.xlu0 %1840, %v152
      %v1842 = vpop.permute.xlu0 %1841
      %1844 = vset.pattern.permute.xlu0 2
      %1845 = vperm.xlu0 %1844, %v153
      %v1846 = vpop.permute.xlu0 %1845
      %1848 = vset.pattern.permute.xlu0 2
      %1849 = vperm.xlu0 %1848, %v154
      %v1850 = vpop.permute.xlu0 %1849
      %1852 = vset.pattern.permute.xlu0 2
      %1853 = vperm.xlu0 %1852, %v155
      %v1854 = vpop.permute.xlu0 %1853
      %1856 = vset.pattern.permute.xlu0 2
      %1857 = vperm.xlu0 %1856, %v156
      %v1858 = vpop.permute.xlu0 %1857
      %1860 = vset.pattern.permute.xlu0 2
      %1861 = vperm.xlu0 %1860, %v157
      %v1862 = vpop.permute.xlu0 %1861
      %1864 = vset.pattern.permute.xlu0 2
      %1865 = vperm.xlu0 %1864, %v158
      %v1866 = vpop.permute.xlu0 %1865
      %1868 = vset.pattern.permute.xlu0 2
      %1869 = vperm.xlu0 %1868, %v159
      %v1870 = vpop.permute.xlu0 %1869
      %1872 = vset.pattern.permute.xlu0 2
      %1873 = vperm.xlu0 %1872, %v160
      %v1874 = vpop.permute.xlu0 %1873
      %1876 = vset.pattern.permute.xlu0 2
      %1877 = vperm.xlu0 %1876, %v161
      %v1878 = vpop.permute.xlu0 %1877
      %1880 = vset.pattern.permute.xlu0 2
      %1881 = vperm.xlu0 %1880, %v162
      %v1882 = vpop.permute.xlu0 %1881
      %1884 = vset.pattern.permute.xlu0 2
      %1885 = vperm.xlu0 %1884, %v163
      %v1886 = vpop.permute.xlu0 %1885
      %1888 = vset.pattern.permute.xlu0 2
      %1889 = vperm.xlu0 %1888, %v164
      %v1890 = vpop.permute.xlu0 %1889
      %1892 = vset.pattern.permute.xlu0 2
      %1893 = vperm.xlu0 %1892, %v165
      %v1894 = vpop.permute.xlu0 %1893
      %1896 = vset.pattern.permute.xlu0 2
      %1897 = vperm.xlu0 %1896, %v166
      %v1898 = vpop.permute.xlu0 %1897
      %1900 = vset.pattern.permute.xlu0 2
      %1901 = vperm.xlu0 %1900, %v167
      %v1902 = vpop.permute.xlu0 %1901
      %1904 = vset.pattern.permute.xlu0 2
      %1905 = vperm.xlu0 %1904, %v168
      %v1906 = vpop.permute.xlu0 %1905
      %1908 = vset.pattern.permute.xlu0 2
      %1909 = vperm.xlu0 %1908, %v169
      %v1910 = vpop.permute.xlu0 %1909
      %1912 = vset.pattern.permute.xlu0 2
      %1913 = vperm.xlu0 %1912, %v170
      %v1914 = vpop.permute.xlu0 %1913
      %1916 = vset.pattern.permute.xlu0 2
      %1917 = vperm.xlu0 %1916, %v171
      %v1918 = vpop.permute.xlu0 %1917
      %1920 = vset.pattern.permute.xlu0 2
      %1921 = vperm.xlu0 %1920, %v172
      %v1922 = vpop.permute.xlu0 %1921
      %1924 = vset.pattern.permute.xlu0 2
      %1925 = vperm.xlu0 %1924, %v173
      %v1926 = vpop.permute.xlu0 %1925
      %1928 = vset.pattern.permute.xlu0 2
      %1929 = vperm.xlu0 %1928, %v174
      %v1930 = vpop.permute.xlu0 %1929
      %1932 = vset.pattern.permute.xlu0 2
      %1933 = vperm.xlu0 %1932, %v175
      %v1934 = vpop.permute.xlu0 %1933
      %1936 = vset.pattern.permute.xlu0 2
      %1937 = vperm.xlu0 %1936, %v176
      %v1938 = vpop.permute.xlu0 %1937
      %1940 = vset.pattern.permute.xlu0 2
      %1941 = vperm.xlu0 %1940, %v177
      %v1942 = vpop.permute.xlu0 %1941
      %1944 = vset.pattern.permute.xlu0 2
      %1945 = vperm.xlu0 %1944, %v178
      %v1946 = vpop.permute.xlu0 %1945
      %1948 = vset.pattern.permute.xlu0 2
      %1949 = vperm.xlu0 %1948, %v179
      %v1950 = vpop.permute.xlu0 %1949
      %1952 = vset.pattern.permute.xlu0 2
      %1953 = vperm.xlu0 %1952, %v180
      %v1954 = vpop.permute.xlu0 %1953
      %1956 = vset.pattern.permute.xlu0 2
      %1957 = vperm.xlu0 %1956, %v181
      %v1958 = vpop.permute.xlu0 %1957
      %1960 = vset.pattern.permute.xlu0 2
      %1961 = vperm.xlu0 %1960, %v182
      %v1962 = vpop.permute.xlu0 %1961
      %1964 = vset.pattern.permute.xlu0 2
      %1965 = vperm.xlu0 %1964, %v183
      %v1966 = vpop.permute.xlu0 %1965
      %1968 = vset.pattern.permute.xlu0 2
      %1969 = vperm.xlu0 %1968, %v184
      %v1970 = vpop.permute.xlu0 %1969
      %1972 = vset.pattern.permute.xlu0 2
      %1973 = vperm.xlu0 %1972, %v185
      %v1974 = vpop.permute.xlu0 %1973
      %1976 = vset.pattern.permute.xlu0 2
      %1977 = vperm.xlu0 %1976, %v186
      %v1978 = vpop.permute.xlu0 %1977
      %1980 = vset.pattern.permute.xlu0 2
      %1981 = vperm.xlu0 %1980, %v187
      %v1982 = vpop.permute.xlu0 %1981
      %1984 = vset.pattern.permute.xlu0 2
      %1985 = vperm.xlu0 %1984, %v188
      %v1986 = vpop.permute.xlu0 %1985
      %1988 = vset.pattern.permute.xlu0 2
      %1989 = vperm.xlu0 %1988, %v189
      %v1990 = vpop.permute.xlu0 %1989
      %1992 = vset.pattern.permute.xlu0 2
      %1993 = vperm.xlu0 %1992, %v190
      %v1994 = vpop.permute.xlu0 %1993
      %1996 = vset.pattern.permute.xlu0 2
      %1997 = vperm.xlu0 %1996, %v191
      %v1998 = vpop.permute.xlu0 %1997
      %2000 = vset.pattern.permute.xlu0 2
      %2001 = vperm.xlu0 %2000, %v192
      %v2002 = vpop.permute.xlu0 %2001
      %2004 = vset.pattern.permute.xlu0 2
      %2005 = vperm.xlu0 %2004, %v193
      %v2006 = vpop.permute.xlu0 %2005
      %2008 = vset.pattern.permute.xlu0 2
      %2009 = vperm.xlu0 %2008, %v194
      %v2010 = vpop.permute.xlu0 %2009
      %2012 = vset.pattern.permute.xlu0 2
      %2013 = vperm.xlu0 %2012, %v195
      %v2014 = vpop.permute.xlu0 %2013
      %2016 = vset.pattern.permute.xlu0 2
      %2017 = vperm.xlu0 %2016, %v196
      %v2018 = vpop.permute.xlu0 %2017
      %2020 = vset.pattern.permute.xlu0 2
      %2021 = vperm.xlu0 %2020, %v197
      %v2022 = vpop.permute.xlu0 %2021
      %2024 = vset.pattern.permute.xlu0 2
      %2025 = vperm.xlu0 %2024, %v198
      %v2026 = vpop.permute.xlu0 %2025
      %2028 = vset.pattern.permute.xlu0 2
      %2029 = vperm.xlu0 %2028, %v199
      %v2030 = vpop.permute.xlu0 %2029
      %2032 = vset.pattern.permute.xlu0 2
      %2033 = vperm.xlu0 %2032, %v200
      %v2034 = vpop.permute.xlu0 %2033
      %2036 = vset.pattern.permute.xlu0 2
      %2037 = vperm.xlu0 %2036, %v201
      %v2038 = vpop.permute.xlu0 %2037
      %2040 = vset.pattern.permute.xlu0 2
      %2041 = vperm.xlu0 %2040, %v202
      %v2042 = vpop.permute.xlu0 %2041
      %2044 = vset.pattern.permute.xlu0 2
      %2045 = vperm.xlu0 %2044, %v203
      %v2046 = vpop.permute.xlu0 %2045
      %2048 = vset.pattern.permute.xlu0 2
      %2049 = vperm.xlu0 %2048, %v204
      %v2050 = vpop.permute.xlu0 %2049
      %2052 = vset.pattern.permute.xlu0 2
      %2053 = vperm.xlu0 %2052, %v205
      %v2054 = vpop.permute.xlu0 %2053
      %2056 = vset.pattern.permute.xlu0 2
      %2057 = vperm.xlu0 %2056, %v206
      %v2058 = vpop.permute.xlu0 %2057
      %2060 = vset.pattern.permute.xlu0 2
      %2061 = vperm.xlu0 %2060, %v207
      %v2062 = vpop.permute.xlu0 %2061
      %2064 = vset.pattern.permute.xlu0 2
      %2065 = vperm.xlu0 %2064, %v208
      %v2066 = vpop.permute.xlu0 %2065
      %2068 = vset.pattern.permute.xlu0 2
      %2069 = vperm.xlu0 %2068, %v209
      %v2070 = vpop.permute.xlu0 %2069
      %2072 = vset.pattern.permute.xlu0 2
      %2073 = vperm.xlu0 %2072, %v210
      %v2074 = vpop.permute.xlu0 %2073
      %2076 = vset.pattern.permute.xlu0 2
      %2077 = vperm.xlu0 %2076, %v211
      %v2078 = vpop.permute.xlu0 %2077
      %2080 = vset.pattern.permute.xlu0 2
      %2081 = vperm.xlu0 %2080, %v212
      %v2082 = vpop.permute.xlu0 %2081
      %2084 = vset.pattern.permute.xlu0 2
      %2085 = vperm.xlu0 %2084, %v213
      %v2086 = vpop.permute.xlu0 %2085
      %2088 = vset.pattern.permute.xlu0 2
      %2089 = vperm.xlu0 %2088, %v214
      %v2090 = vpop.permute.xlu0 %2089
      %2092 = vset.pattern.permute.xlu0 2
      %2093 = vperm.xlu0 %2092, %v215
      %v2094 = vpop.permute.xlu0 %2093
      %2096 = vset.pattern.permute.xlu0 2
      %2097 = vperm.xlu0 %2096, %v216
      %v2098 = vpop.permute.xlu0 %2097
      %2100 = vset.pattern.permute.xlu0 2
      %2101 = vperm.xlu0 %2100, %v217
      %v2102 = vpop.permute.xlu0 %2101
      %2104 = vset.pattern.permute.xlu0 2
      %2105 = vperm.xlu0 %2104, %v218
      %v2106 = vpop.permute.xlu0 %2105
      %2108 = vset.pattern.permute.xlu0 2
      %2109 = vperm.xlu0 %2108, %v219
      %v2110 = vpop.permute.xlu0 %2109
      %2112 = vset.pattern.permute.xlu0 2
      %2113 = vperm.xlu0 %2112, %v220
      %v2114 = vpop.permute.xlu0 %2113
      %2116 = vset.pattern.permute.xlu0 2
      %2117 = vperm.xlu0 %2116, %v221
      %v2118 = vpop.permute.xlu0 %2117
      %2120 = vset.pattern.permute.xlu0 2
      %2121 = vperm.xlu0 %2120, %v222
      %v2122 = vpop.permute.xlu0 %2121
      %2124 = vset.pattern.permute.xlu0 2
      %2125 = vperm.xlu0 %2124, %v223
      %v2126 = vpop.permute.xlu0 %2125
      %2128 = vset.pattern.permute.xlu0 2
      %2129 = vperm.xlu0 %2128, %v224
      %v2130 = vpop.permute.xlu0 %2129
      %2132 = vset.pattern.permute.xlu0 2
      %2133 = vperm.xlu0 %2132, %v225
      %v2134 = vpop.permute.xlu0 %2133
      %2136 = vset.pattern.permute.xlu0 2
      %2137 = vperm.xlu0 %2136, %v226
      %v2138 = vpop.permute.xlu0 %2137
      %2140 = vset.pattern.permute.xlu0 2
      %2141 = vperm.xlu0 %2140, %v227
      %v2142 = vpop.permute.xlu0 %2141
      %2144 = vset.pattern.permute.xlu0 2
      %2145 = vperm.xlu0 %2144, %v228
      %v2146 = vpop.permute.xlu0 %2145
      %2148 = vset.pattern.permute.xlu0 2
      %2149 = vperm.xlu0 %2148, %v229
      %v2150 = vpop.permute.xlu0 %2149
      %2152 = vset.pattern.permute.xlu0 2
      %2153 = vperm.xlu0 %2152, %v230
      %v2154 = vpop.permute.xlu0 %2153
      %2156 = vset.pattern.permute.xlu0 2
      %2157 = vperm.xlu0 %2156, %v231
      %v2158 = vpop.permute.xlu0 %2157
      %2160 = vset.pattern.permute.xlu0 2
      %2161 = vperm.xlu0 %2160, %v232
      %v2162 = vpop.permute.xlu0 %2161
      %2164 = vset.pattern.permute.xlu0 2
      %2165 = vperm.xlu0 %2164, %v233
      %v2166 = vpop.permute.xlu0 %2165
      %2168 = vset.pattern.permute.xlu0 2
      %2169 = vperm.xlu0 %2168, %v234
      %v2170 = vpop.permute.xlu0 %2169
      %2172 = vset.pattern.permute.xlu0 2
      %2173 = vperm.xlu0 %2172, %v235
      %v2174 = vpop.permute.xlu0 %2173
      %2176 = vset.pattern.permute.xlu0 2
      %2177 = vperm.xlu0 %2176, %v236
      %v2178 = vpop.permute.xlu0 %2177
      %2180 = vset.pattern.permute.xlu0 2
      %2181 = vperm.xlu0 %2180, %v237
      %v2182 = vpop.permute.xlu0 %2181
      %2184 = vset.pattern.permute.xlu0 2
      %2185 = vperm.xlu0 %2184, %v238
      %v2186 = vpop.permute.xlu0 %2185
      %2188 = vset.pattern.permute.xlu0 2
      %2189 = vperm.xlu0 %2188, %v239
      %v2190 = vpop.permute.xlu0 %2189
      %2192 = vset.pattern.permute.xlu0 2
      %2193 = vperm.xlu0 %2192, %v240
      %v2194 = vpop.permute.xlu0 %2193
      %2196 = vset.pattern.permute.xlu0 2
      %2197 = vperm.xlu0 %2196, %v241
      %v2198 = vpop.permute.xlu0 %2197
      %2200 = vset.pattern.permute.xlu0 2
      %2201 = vperm.xlu0 %2200, %v242
      %v2202 = vpop.permute.xlu0 %2201
      %2204 = vset.pattern.permute.xlu0 2
      %2205 = vperm.xlu0 %2204, %v243
      %v2206 = vpop.permute.xlu0 %2205
      %2208 = vset.pattern.permute.xlu0 2
      %2209 = vperm.xlu0 %2208, %v244
      %v2210 = vpop.permute.xlu0 %2209
      %2212 = vset.pattern.permute.xlu0 2
      %2213 = vperm.xlu0 %2212, %v245
      %v2214 = vpop.permute.xlu0 %2213
      %2216 = vset.pattern.permute.xlu0 2
      %2217 = vperm.xlu0 %2216, %v246
      %v2218 = vpop.permute.xlu0 %2217
      %2220 = vset.pattern.permute.xlu0 2
      %2221 = vperm.xlu0 %2220, %v247
      %v2222 = vpop.permute.xlu0 %2221
      %2224 = vset.pattern.permute.xlu0 2
      %2225 = vperm.xlu0 %2224, %v248
      %v2226 = vpop.permute.xlu0 %2225
      %2228 = vset.pattern.permute.xlu0 2
      %2229 = vperm.xlu0 %2228, %v249
      %v2230 = vpop.permute.xlu0 %2229
      %2232 = vset.pattern.permute.xlu0 2
      %2233 = vperm.xlu0 %2232, %v250
      %v2234 = vpop.permute.xlu0 %2233
      %2236 = vset.pattern.permute.xlu0 2
      %2237 = vperm.xlu0 %2236, %v251
      %v2238 = vpop.permute.xlu0 %2237
      %2240 = vset.pattern.permute.xlu0 2
      %2241 = vperm.xlu0 %2240, %v252
      %v2242 = vpop.permute.xlu0 %2241
      %2244 = vset.pattern.permute.xlu0 2
      %2245 = vperm.xlu0 %2244, %v253
      %v2246 = vpop.permute.xlu0 %2245
      %2248 = vset.pattern.permute.xlu0 2
      %2249 = vperm.xlu0 %2248, %v254
      %v2250 = vpop.permute.xlu0 %2249
      %2252 = vset.pattern.permute.xlu0 2
      %2253 = vperm.xlu0 %2252, %v255
      %v2254 = vpop.permute.xlu0 %2253
      %2256 = vset.pattern.permute.xlu0 2
      %2257 = vperm.xlu0 %2256, %v256
      %v2258 = vpop.permute.xlu0 %2257
      %2260 = vset.pattern.permute.xlu0 2
      %2261 = vperm.xlu0 %2260, %v257
      %v2262 = vpop.permute.xlu0 %2261
      %2264 = vset.pattern.permute.xlu0 2
      %2265 = vperm.xlu0 %2264, %v258
      %v2266 = vpop.permute.xlu0 %2265
      %2268 = vset.pattern.permute.xlu0 2
      %2269 = vperm.xlu0 %2268, %v259
      %v2270 = vpop.permute.xlu0 %2269
      %2272 = vset.pattern.permute.xlu0 2
      %2273 = vperm.xlu0 %2272, %v260
      %v2274 = vpop.permute.xlu0 %2273
      %2276 = vset.pattern.permute.xlu0 2
      %2277 = vperm.xlu0 %2276, %v261
      %v2278 = vpop.permute.xlu0 %2277
      %2280 = vset.pattern.permute.xlu0 2
      %2281 = vperm.xlu0 %2280, %v262
      %v2282 = vpop.permute.xlu0 %2281
      %2284 = vset.pattern.permute.xlu0 2
      %2285 = vperm.xlu0 %2284, %v263
      %v2286 = vpop.permute.xlu0 %2285
      %2288 = vset.pattern.permute.xlu0 2
      %2289 = vperm.xlu0 %2288, %v264
      %v2290 = vpop.permute.xlu0 %2289
      %2292 = vset.pattern.permute.xlu0 2
      %2293 = vperm.xlu0 %2292, %v265
      %v2294 = vpop.permute.xlu0 %2293
      %2296 = vset.pattern.permute.xlu0 2
      %2297 = vperm.xlu0 %2296, %v266
      %v2298 = vpop.permute.xlu0 %2297
      %2300 = vset.pattern.permute.xlu0 2
      %2301 = vperm.xlu0 %2300, %v267
      %v2302 = vpop.permute.xlu0 %2301
      %2304 = vset.pattern.permute.xlu0 2
      %2305 = vperm.xlu0 %2304, %v268
      %v2306 = vpop.permute.xlu0 %2305
      %2308 = vset.pattern.permute.xlu0 2
      %2309 = vperm.xlu0 %2308, %v269
      %v2310 = vpop.permute.xlu0 %2309
      %2312 = vset.pattern.permute.xlu0 2
      %2313 = vperm.xlu0 %2312, %v270
      %v2314 = vpop.permute.xlu0 %2313
      %2316 = vset.pattern.permute.xlu0 2
      %2317 = vperm.xlu0 %2316, %v271
      %v2318 = vpop.permute.xlu0 %2317
      %2320 = vset.pattern.permute.xlu0 2
      %2321 = vperm.xlu0 %2320, %v272
      %v2322 = vpop.permute.xlu0 %2321
      %2324 = vset.pattern.permute.xlu0 2
      %2325 = vperm.xlu0 %2324, %v273
      %v2326 = vpop.permute.xlu0 %2325
      %2328 = vset.pattern.permute.xlu0 2
      %2329 = vperm.xlu0 %2328, %v274
      %v2330 = vpop.permute.xlu0 %2329
      %v2332 = vlaneseq
      %v2333 = vshrl.u32 %v2332, 7
      %v2334 = vsub.s32 2, %v2333
      %v2335 = vrot.slane %v275, %v2334
      %v2336 = vmul.f32 %v1822, %v2335
      %v2337 = vmul.f32 %v1826, %v2335
      %v2338 = vmul.f32 %v1830, %v2335
      %v2339 = vmul.f32 %v1834, %v2335
      %v2340 = vmul.f32 %v1838, %v2335
      %v2341 = vmul.f32 %v1842, %v2335
      %v2342 = vmul.f32 %v1846, %v2335
      %v2343 = vmul.f32 %v1850, %v2335
      %v2344 = vmul.f32 %v1854, %v2335
      %v2345 = vmul.f32 %v1858, %v2335
      %v2346 = vmul.f32 %v1862, %v2335
      %v2347 = vmul.f32 %v1866, %v2335
      %v2348 = vmul.f32 %v1870, %v2335
      %v2349 = vmul.f32 %v1874, %v2335
      %v2350 = vmul.f32 %v1878, %v2335
      %v2351 = vmul.f32 %v1882, %v2335
      %v2352 = vmul.f32 %v1886, %v2335
      %v2353 = vmul.f32 %v1890, %v2335
      %v2354 = vmul.f32 %v1894, %v2335
      %v2355 = vmul.f32 %v1898, %v2335
      %v2356 = vmul.f32 %v1902, %v2335
      %v2357 = vmul.f32 %v1906, %v2335
      %v2358 = vmul.f32 %v1910, %v2335
      %v2359 = vmul.f32 %v1914, %v2335
      %v2360 = vmul.f32 %v1918, %v2335
      %v2361 = vmul.f32 %v1922, %v2335
      %v2362 = vmul.f32 %v1926, %v2335
      %v2363 = vmul.f32 %v1930, %v2335
      %v2364 = vmul.f32 %v1934, %v2335
      %v2365 = vmul.f32 %v1938, %v2335
      %v2366 = vmul.f32 %v1942, %v2335
      %v2367 = vmul.f32 %v1946, %v2335
      %v2368 = vmul.f32 %v1950, %v2335
      %v2369 = vmul.f32 %v1954, %v2335
      %v2370 = vmul.f32 %v1958, %v2335
      %v2371 = vmul.f32 %v1962, %v2335
      %v2372 = vmul.f32 %v1966, %v2335
      %v2373 = vmul.f32 %v1970, %v2335
      %v2374 = vmul.f32 %v1974, %v2335
      %v2375 = vmul.f32 %v1978, %v2335
      %v2376 = vmul.f32 %v1982, %v2335
      %v2377 = vmul.f32 %v1986, %v2335
      %v2378 = vmul.f32 %v1990, %v2335
      %v2379 = vmul.f32 %v1994, %v2335
      %v2380 = vmul.f32 %v1998, %v2335
      %v2381 = vmul.f32 %v2002, %v2335
      %v2382 = vmul.f32 %v2006, %v2335
      %v2383 = vmul.f32 %v2010, %v2335
      %v2384 = vmul.f32 %v2014, %v2335
      %v2385 = vmul.f32 %v2018, %v2335
      %v2386 = vmul.f32 %v2022, %v2335
      %v2387 = vmul.f32 %v2026, %v2335
      %v2388 = vmul.f32 %v2030, %v2335
      %v2389 = vmul.f32 %v2034, %v2335
      %v2390 = vmul.f32 %v2038, %v2335
      %v2391 = vmul.f32 %v2042, %v2335
      %v2392 = vmul.f32 %v2046, %v2335
      %v2393 = vmul.f32 %v2050, %v2335
      %v2394 = vmul.f32 %v2054, %v2335
      %v2395 = vmul.f32 %v2058, %v2335
      %v2396 = vmul.f32 %v2062, %v2335
      %v2397 = vmul.f32 %v2066, %v2335
      %v2398 = vmul.f32 %v2070, %v2335
      %v2399 = vmul.f32 %v2074, %v2335
      %v2400 = vmul.f32 %v2078, %v2335
      %v2401 = vmul.f32 %v2082, %v2335
      %v2402 = vmul.f32 %v2086, %v2335
      %v2403 = vmul.f32 %v2090, %v2335
      %v2404 = vmul.f32 %v2094, %v2335
      %v2405 = vmul.f32 %v2098, %v2335
      %v2406 = vmul.f32 %v2102, %v2335
      %v2407 = vmul.f32 %v2106, %v2335
      %v2408 = vmul.f32 %v2110, %v2335
      %v2409 = vmul.f32 %v2114, %v2335
      %v2410 = vmul.f32 %v2118, %v2335
      %v2411 = vmul.f32 %v2122, %v2335
      %v2412 = vmul.f32 %v2126, %v2335
      %v2413 = vmul.f32 %v2130, %v2335
      %v2414 = vmul.f32 %v2134, %v2335
      %v2415 = vmul.f32 %v2138, %v2335
      %v2416 = vmul.f32 %v2142, %v2335
      %v2417 = vmul.f32 %v2146, %v2335
      %v2418 = vmul.f32 %v2150, %v2335
      %v2419 = vmul.f32 %v2154, %v2335
      %v2420 = vmul.f32 %v2158, %v2335
      %v2421 = vmul.f32 %v2162, %v2335
      %v2422 = vmul.f32 %v2166, %v2335
      %v2423 = vmul.f32 %v2170, %v2335
      %v2424 = vmul.f32 %v2174, %v2335
      %v2425 = vmul.f32 %v2178, %v2335
      %v2426 = vmul.f32 %v2182, %v2335
      %v2427 = vmul.f32 %v2186, %v2335
      %v2428 = vmul.f32 %v2190, %v2335
      %v2429 = vmul.f32 %v2194, %v2335
      %v2430 = vmul.f32 %v2198, %v2335
      %v2431 = vmul.f32 %v2202, %v2335
      %v2432 = vmul.f32 %v2206, %v2335
      %v2433 = vmul.f32 %v2210, %v2335
      %v2434 = vmul.f32 %v2214, %v2335
      %v2435 = vmul.f32 %v2218, %v2335
      %v2436 = vmul.f32 %v2222, %v2335
      %v2437 = vmul.f32 %v2226, %v2335
      %v2438 = vmul.f32 %v2230, %v2335
      %v2439 = vmul.f32 %v2234, %v2335
      %v2440 = vmul.f32 %v2238, %v2335
      %v2441 = vmul.f32 %v2242, %v2335
      %v2442 = vmul.f32 %v2246, %v2335
      %v2443 = vmul.f32 %v2250, %v2335
      %v2444 = vmul.f32 %v2254, %v2335
      %v2445 = vmul.f32 %v2258, %v2335
      %v2446 = vmul.f32 %v2262, %v2335
      %v2447 = vmul.f32 %v2266, %v2335
      %v2448 = vmul.f32 %v2270, %v2335
      %v2449 = vmul.f32 %v2274, %v2335
      %v2450 = vmul.f32 %v2278, %v2335
      %v2451 = vmul.f32 %v2282, %v2335
      %v2452 = vmul.f32 %v2286, %v2335
      %v2453 = vmul.f32 %v2290, %v2335
      %v2454 = vmul.f32 %v2294, %v2335
      %v2455 = vmul.f32 %v2298, %v2335
      %v2456 = vmul.f32 %v2302, %v2335
      %v2457 = vmul.f32 %v2306, %v2335
      %v2458 = vmul.f32 %v2310, %v2335
      %v2459 = vmul.f32 %v2314, %v2335
      %v2460 = vmul.f32 %v2318, %v2335
      %v2461 = vmul.f32 %v2322, %v2335
      %v2462 = vmul.f32 %v2326, %v2335
      %v2463 = vmul.f32 %v2330, %v2335
      %v2464 = vadd.f32 %v1692, %v2336
      %v2465 = vadd.f32 %v1693, %v2337
      %v2466 = vadd.f32 %v1694, %v2338
      %v2467 = vadd.f32 %v1695, %v2339
      %v2468 = vadd.f32 %v1696, %v2340
      %v2469 = vadd.f32 %v1697, %v2341
      %v2470 = vadd.f32 %v1698, %v2342
      %v2471 = vadd.f32 %v1699, %v2343
      %v2472 = vadd.f32 %v1700, %v2344
      %v2473 = vadd.f32 %v1701, %v2345
      %v2474 = vadd.f32 %v1702, %v2346
      %v2475 = vadd.f32 %v1703, %v2347
      %v2476 = vadd.f32 %v1704, %v2348
      %v2477 = vadd.f32 %v1705, %v2349
      %v2478 = vadd.f32 %v1706, %v2350
      %v2479 = vadd.f32 %v1707, %v2351
      %v2480 = vadd.f32 %v1708, %v2352
      %v2481 = vadd.f32 %v1709, %v2353
      %v2482 = vadd.f32 %v1710, %v2354
      %v2483 = vadd.f32 %v1711, %v2355
      %v2484 = vadd.f32 %v1712, %v2356
      %v2485 = vadd.f32 %v1713, %v2357
      %v2486 = vadd.f32 %v1714, %v2358
      %v2487 = vadd.f32 %v1715, %v2359
      %v2488 = vadd.f32 %v1716, %v2360
      %v2489 = vadd.f32 %v1717, %v2361
      %v2490 = vadd.f32 %v1718, %v2362
      %v2491 = vadd.f32 %v1719, %v2363
      %v2492 = vadd.f32 %v1720, %v2364
      %v2493 = vadd.f32 %v1721, %v2365
      %v2494 = vadd.f32 %v1722, %v2366
      %v2495 = vadd.f32 %v1723, %v2367
      %v2496 = vadd.f32 %v1724, %v2368
      %v2497 = vadd.f32 %v1725, %v2369
      %v2498 = vadd.f32 %v1726, %v2370
      %v2499 = vadd.f32 %v1727, %v2371
      %v2500 = vadd.f32 %v1728, %v2372
      %v2501 = vadd.f32 %v1729, %v2373
      %v2502 = vadd.f32 %v1730, %v2374
      %v2503 = vadd.f32 %v1731, %v2375
      %v2504 = vadd.f32 %v1732, %v2376
      %v2505 = vadd.f32 %v1733, %v2377
      %v2506 = vadd.f32 %v1734, %v2378
      %v2507 = vadd.f32 %v1735, %v2379
      %v2508 = vadd.f32 %v1736, %v2380
      %v2509 = vadd.f32 %v1737, %v2381
      %v2510 = vadd.f32 %v1738, %v2382
      %v2511 = vadd.f32 %v1739, %v2383
      %v2512 = vadd.f32 %v1740, %v2384
      %v2513 = vadd.f32 %v1741, %v2385
      %v2514 = vadd.f32 %v1742, %v2386
      %v2515 = vadd.f32 %v1743, %v2387
      %v2516 = vadd.f32 %v1744, %v2388
      %v2517 = vadd.f32 %v1745, %v2389
      %v2518 = vadd.f32 %v1746, %v2390
      %v2519 = vadd.f32 %v1747, %v2391
      %v2520 = vadd.f32 %v1748, %v2392
      %v2521 = vadd.f32 %v1749, %v2393
      %v2522 = vadd.f32 %v1750, %v2394
      %v2523 = vadd.f32 %v1751, %v2395
      %v2524 = vadd.f32 %v1752, %v2396
      %v2525 = vadd.f32 %v1753, %v2397
      %v2526 = vadd.f32 %v1754, %v2398
      %v2527 = vadd.f32 %v1755, %v2399
      %v2528 = vadd.f32 %v1756, %v2400
      %v2529 = vadd.f32 %v1757, %v2401
      %v2530 = vadd.f32 %v1758, %v2402
      %v2531 = vadd.f32 %v1759, %v2403
      %v2532 = vadd.f32 %v1760, %v2404
      %v2533 = vadd.f32 %v1761, %v2405
      %v2534 = vadd.f32 %v1762, %v2406
      %v2535 = vadd.f32 %v1763, %v2407
      %v2536 = vadd.f32 %v1764, %v2408
      %v2537 = vadd.f32 %v1765, %v2409
      %v2538 = vadd.f32 %v1766, %v2410
      %v2539 = vadd.f32 %v1767, %v2411
      %v2540 = vadd.f32 %v1768, %v2412
      %v2541 = vadd.f32 %v1769, %v2413
      %v2542 = vadd.f32 %v1770, %v2414
      %v2543 = vadd.f32 %v1771, %v2415
      %v2544 = vadd.f32 %v1772, %v2416
      %v2545 = vadd.f32 %v1773, %v2417
      %v2546 = vadd.f32 %v1774, %v2418
      %v2547 = vadd.f32 %v1775, %v2419
      %v2548 = vadd.f32 %v1776, %v2420
      %v2549 = vadd.f32 %v1777, %v2421
      %v2550 = vadd.f32 %v1778, %v2422
      %v2551 = vadd.f32 %v1779, %v2423
      %v2552 = vadd.f32 %v1780, %v2424
      %v2553 = vadd.f32 %v1781, %v2425
      %v2554 = vadd.f32 %v1782, %v2426
      %v2555 = vadd.f32 %v1783, %v2427
      %v2556 = vadd.f32 %v1784, %v2428
      %v2557 = vadd.f32 %v1785, %v2429
      %v2558 = vadd.f32 %v1786, %v2430
      %v2559 = vadd.f32 %v1787, %v2431
      %v2560 = vadd.f32 %v1788, %v2432
      %v2561 = vadd.f32 %v1789, %v2433
      %v2562 = vadd.f32 %v1790, %v2434
      %v2563 = vadd.f32 %v1791, %v2435
      %v2564 = vadd.f32 %v1792, %v2436
      %v2565 = vadd.f32 %v1793, %v2437
      %v2566 = vadd.f32 %v1794, %v2438
      %v2567 = vadd.f32 %v1795, %v2439
      %v2568 = vadd.f32 %v1796, %v2440
      %v2569 = vadd.f32 %v1797, %v2441
      %v2570 = vadd.f32 %v1798, %v2442
      %v2571 = vadd.f32 %v1799, %v2443
      %v2572 = vadd.f32 %v1800, %v2444
      %v2573 = vadd.f32 %v1801, %v2445
      %v2574 = vadd.f32 %v1802, %v2446
      %v2575 = vadd.f32 %v1803, %v2447
      %v2576 = vadd.f32 %v1804, %v2448
      %v2577 = vadd.f32 %v1805, %v2449
      %v2578 = vadd.f32 %v1806, %v2450
      %v2579 = vadd.f32 %v1807, %v2451
      %v2580 = vadd.f32 %v1808, %v2452
      %v2581 = vadd.f32 %v1809, %v2453
      %v2582 = vadd.f32 %v1810, %v2454
      %v2583 = vadd.f32 %v1811, %v2455
      %v2584 = vadd.f32 %v1812, %v2456
      %v2585 = vadd.f32 %v1813, %v2457
      %v2586 = vadd.f32 %v1814, %v2458
      %v2587 = vadd.f32 %v1815, %v2459
      %v2588 = vadd.f32 %v1816, %v2460
      %v2589 = vadd.f32 %v1817, %v2461
      %v2590 = vadd.f32 %v1818, %v2462
      %v2591 = vadd.f32 %v1819, %v2463
      %v2592 = vmax.f32 %v2464, 0.0
      %v2593 = vmax.f32 %v2465, 0.0
      %v2594 = vmax.f32 %v2466, 0.0
      %v2595 = vmax.f32 %v2467, 0.0
      %v2596 = vmax.f32 %v2468, 0.0
      %v2597 = vmax.f32 %v2469, 0.0
      %v2598 = vmax.f32 %v2470, 0.0
      %v2599 = vmax.f32 %v2471, 0.0
      %v2600 = vmax.f32 %v2472, 0.0
      %v2601 = vmax.f32 %v2473, 0.0
      %v2602 = vmax.f32 %v2474, 0.0
      %v2603 = vmax.f32 %v2475, 0.0
      %v2604 = vmax.f32 %v2476, 0.0
      %v2605 = vmax.f32 %v2477, 0.0
      %v2606 = vmax.f32 %v2478, 0.0
      %v2607 = vmax.f32 %v2479, 0.0
      %v2608 = vmax.f32 %v2480, 0.0
      %v2609 = vmax.f32 %v2481, 0.0
      %v2610 = vmax.f32 %v2482, 0.0
      %v2611 = vmax.f32 %v2483, 0.0
      %v2612 = vmax.f32 %v2484, 0.0
      %v2613 = vmax.f32 %v2485, 0.0
      %v2614 = vmax.f32 %v2486, 0.0
      %v2615 = vmax.f32 %v2487, 0.0
      %v2616 = vmax.f32 %v2488, 0.0
      %v2617 = vmax.f32 %v2489, 0.0
      %v2618 = vmax.f32 %v2490, 0.0
      %v2619 = vmax.f32 %v2491, 0.0
      %v2620 = vmax.f32 %v2492, 0.0
      %v2621 = vmax.f32 %v2493, 0.0
      %v2622 = vmax.f32 %v2494, 0.0
      %v2623 = vmax.f32 %v2495, 0.0
      %v2624 = vmax.f32 %v2496, 0.0
      %v2625 = vmax.f32 %v2497, 0.0
      %v2626 = vmax.f32 %v2498, 0.0
      %v2627 = vmax.f32 %v2499, 0.0
      %v2628 = vmax.f32 %v2500, 0.0
      %v2629 = vmax.f32 %v2501, 0.0
      %v2630 = vmax.f32 %v2502, 0.0
      %v2631 = vmax.f32 %v2503, 0.0
      %v2632 = vmax.f32 %v2504, 0.0
      %v2633 = vmax.f32 %v2505, 0.0
      %v2634 = vmax.f32 %v2506, 0.0
      %v2635 = vmax.f32 %v2507, 0.0
      %v2636 = vmax.f32 %v2508, 0.0
      %v2637 = vmax.f32 %v2509, 0.0
      %v2638 = vmax.f32 %v2510, 0.0
      %v2639 = vmax.f32 %v2511, 0.0
      %v2640 = vmax.f32 %v2512, 0.0
      %v2641 = vmax.f32 %v2513, 0.0
      %v2642 = vmax.f32 %v2514, 0.0
      %v2643 = vmax.f32 %v2515, 0.0
      %v2644 = vmax.f32 %v2516, 0.0
      %v2645 = vmax.f32 %v2517, 0.0
      %v2646 = vmax.f32 %v2518, 0.0
      %v2647 = vmax.f32 %v2519, 0.0
      %v2648 = vmax.f32 %v2520, 0.0
      %v2649 = vmax.f32 %v2521, 0.0
      %v2650 = vmax.f32 %v2522, 0.0
      %v2651 = vmax.f32 %v2523, 0.0
      %v2652 = vmax.f32 %v2524, 0.0
      %v2653 = vmax.f32 %v2525, 0.0
      %v2654 = vmax.f32 %v2526, 0.0
      %v2655 = vmax.f32 %v2527, 0.0
      %v2656 = vmax.f32 %v2528, 0.0
      %v2657 = vmax.f32 %v2529, 0.0
      %v2658 = vmax.f32 %v2530, 0.0
      %v2659 = vmax.f32 %v2531, 0.0
      %v2660 = vmax.f32 %v2532, 0.0
      %v2661 = vmax.f32 %v2533, 0.0
      %v2662 = vmax.f32 %v2534, 0.0
      %v2663 = vmax.f32 %v2535, 0.0
      %v2664 = vmax.f32 %v2536, 0.0
      %v2665 = vmax.f32 %v2537, 0.0
      %v2666 = vmax.f32 %v2538, 0.0
      %v2667 = vmax.f32 %v2539, 0.0
      %v2668 = vmax.f32 %v2540, 0.0
      %v2669 = vmax.f32 %v2541, 0.0
      %v2670 = vmax.f32 %v2542, 0.0
      %v2671 = vmax.f32 %v2543, 0.0
      %v2672 = vmax.f32 %v2544, 0.0
      %v2673 = vmax.f32 %v2545, 0.0
      %v2674 = vmax.f32 %v2546, 0.0
      %v2675 = vmax.f32 %v2547, 0.0
      %v2676 = vmax.f32 %v2548, 0.0
      %v2677 = vmax.f32 %v2549, 0.0
      %v2678 = vmax.f32 %v2550, 0.0
      %v2679 = vmax.f32 %v2551, 0.0
      %v2680 = vmax.f32 %v2552, 0.0
      %v2681 = vmax.f32 %v2553, 0.0
      %v2682 = vmax.f32 %v2554, 0.0
      %v2683 = vmax.f32 %v2555, 0.0
      %v2684 = vmax.f32 %v2556, 0.0
      %v2685 = vmax.f32 %v2557, 0.0
      %v2686 = vmax.f32 %v2558, 0.0
      %v2687 = vmax.f32 %v2559, 0.0
      %v2688 = vmax.f32 %v2560, 0.0
      %v2689 = vmax.f32 %v2561, 0.0
      %v2690 = vmax.f32 %v2562, 0.0
      %v2691 = vmax.f32 %v2563, 0.0
      %v2692 = vmax.f32 %v2564, 0.0
      %v2693 = vmax.f32 %v2565, 0.0
      %v2694 = vmax.f32 %v2566, 0.0
      %v2695 = vmax.f32 %v2567, 0.0
      %v2696 = vmax.f32 %v2568, 0.0
      %v2697 = vmax.f32 %v2569, 0.0
      %v2698 = vmax.f32 %v2570, 0.0
      %v2699 = vmax.f32 %v2571, 0.0
      %v2700 = vmax.f32 %v2572, 0.0
      %v2701 = vmax.f32 %v2573, 0.0
      %v2702 = vmax.f32 %v2574, 0.0
      %v2703 = vmax.f32 %v2575, 0.0
      %v2704 = vmax.f32 %v2576, 0.0
      %v2705 = vmax.f32 %v2577, 0.0
      %v2706 = vmax.f32 %v2578, 0.0
      %v2707 = vmax.f32 %v2579, 0.0
      %v2708 = vmax.f32 %v2580, 0.0
      %v2709 = vmax.f32 %v2581, 0.0
      %v2710 = vmax.f32 %v2582, 0.0
      %v2711 = vmax.f32 %v2583, 0.0
      %v2712 = vmax.f32 %v2584, 0.0
      %v2713 = vmax.f32 %v2585, 0.0
      %v2714 = vmax.f32 %v2586, 0.0
      %v2715 = vmax.f32 %v2587, 0.0
      %v2716 = vmax.f32 %v2588, 0.0
      %v2717 = vmax.f32 %v2589, 0.0
      %v2718 = vmax.f32 %v2590, 0.0
      %v2719 = vmax.f32 %v2591, 0.0
      %vm2720 = vcmask 523264
      %2721 = vst.msk [vmem:[%s145] sm:$0xff] %vm2720, %v2592
      %2722 = vst.msk [vmem:[%s145 + $0x8] sm:$0xff] %vm2720, %v2593
      %2723 = vst.msk [vmem:[%s145 + $0x10] sm:$0xff] %vm2720, %v2594
      %2724 = vst.msk [vmem:[%s145 + $0x18] sm:$0xff] %vm2720, %v2595
      %2725 = vst.msk [vmem:[%s145 + $0x20] sm:$0xff] %vm2720, %v2596
      %2726 = vst.msk [vmem:[%s145 + $0x28] sm:$0xff] %vm2720, %v2597
      %2727 = vst.msk [vmem:[%s145 + $0x30] sm:$0xff] %vm2720, %v2598
      %2728 = vst.msk [vmem:[%s145 + $0x38] sm:$0xff] %vm2720, %v2599
      %2729 = vst.msk [vmem:[%s145 + $0x40] sm:$0xff] %vm2720, %v2600
      %2730 = vst.msk [vmem:[%s145 + $0x48] sm:$0xff] %vm2720, %v2601
      %2731 = vst.msk [vmem:[%s145 + $0x50] sm:$0xff] %vm2720, %v2602
      %2732 = vst.msk [vmem:[%s145 + $0x58] sm:$0xff] %vm2720, %v2603
      %2733 = vst.msk [vmem:[%s145 + $0x60] sm:$0xff] %vm2720, %v2604
      %2734 = vst.msk [vmem:[%s145 + $0x68] sm:$0xff] %vm2720, %v2605
      %2735 = vst.msk [vmem:[%s145 + $0x70] sm:$0xff] %vm2720, %v2606
      %2736 = vst.msk [vmem:[%s145 + $0x78] sm:$0xff] %vm2720, %v2607
      %2737 = vst.msk [vmem:[%s145 + $0x80] sm:$0xff] %vm2720, %v2608
      %2738 = vst.msk [vmem:[%s145 + $0x88] sm:$0xff] %vm2720, %v2609
      %2739 = vst.msk [vmem:[%s145 + $0x90] sm:$0xff] %vm2720, %v2610
      %2740 = vst.msk [vmem:[%s145 + $0x98] sm:$0xff] %vm2720, %v2611
      %2741 = vst.msk [vmem:[%s145 + $0xa0] sm:$0xff] %vm2720, %v2612
      %2742 = vst.msk [vmem:[%s145 + $0xa8] sm:$0xff] %vm2720, %v2613
      %2743 = vst.msk [vmem:[%s145 + $0xb0] sm:$0xff] %vm2720, %v2614
      %2744 = vst.msk [vmem:[%s145 + $0xb8] sm:$0xff] %vm2720, %v2615
      %2745 = vst.msk [vmem:[%s145 + $0xc0] sm:$0xff] %vm2720, %v2616
      %2746 = vst.msk [vmem:[%s145 + $0xc8] sm:$0xff] %vm2720, %v2617
      %2747 = vst.msk [vmem:[%s145 + $0xd0] sm:$0xff] %vm2720, %v2618
      %2748 = vst.msk [vmem:[%s145 + $0xd8] sm:$0xff] %vm2720, %v2619
      %2749 = vst.msk [vmem:[%s145 + $0xe0] sm:$0xff] %vm2720, %v2620
      %2750 = vst.msk [vmem:[%s145 + $0xe8] sm:$0xff] %vm2720, %v2621
      %2751 = vst.msk [vmem:[%s145 + $0xf0] sm:$0xff] %vm2720, %v2622
      %2752 = vst.msk [vmem:[%s145 + $0xf8] sm:$0xff] %vm2720, %v2623
      %2753 = vst.msk [vmem:[%s145 + $0x100] sm:$0xff] %vm2720, %v2624
      %2754 = vst.msk [vmem:[%s145 + $0x108] sm:$0xff] %vm2720, %v2625
      %2755 = vst.msk [vmem:[%s145 + $0x110] sm:$0xff] %vm2720, %v2626
      %2756 = vst.msk [vmem:[%s145 + $0x118] sm:$0xff] %vm2720, %v2627
      %2757 = vst.msk [vmem:[%s145 + $0x120] sm:$0xff] %vm2720, %v2628
      %2758 = vst.msk [vmem:[%s145 + $0x128] sm:$0xff] %vm2720, %v2629
      %2759 = vst.msk [vmem:[%s145 + $0x130] sm:$0xff] %vm2720, %v2630
      %2760 = vst.msk [vmem:[%s145 + $0x138] sm:$0xff] %vm2720, %v2631
      %2761 = vst.msk [vmem:[%s145 + $0x140] sm:$0xff] %vm2720, %v2632
      %2762 = vst.msk [vmem:[%s145 + $0x148] sm:$0xff] %vm2720, %v2633
      %2763 = vst.msk [vmem:[%s145 + $0x150] sm:$0xff] %vm2720, %v2634
      %2764 = vst.msk [vmem:[%s145 + $0x158] sm:$0xff] %vm2720, %v2635
      %2765 = vst.msk [vmem:[%s145 + $0x160] sm:$0xff] %vm2720, %v2636
      %2766 = vst.msk [vmem:[%s145 + $0x168] sm:$0xff] %vm2720, %v2637
      %2767 = vst.msk [vmem:[%s145 + $0x170] sm:$0xff] %vm2720, %v2638
      %2768 = vst.msk [vmem:[%s145 + $0x178] sm:$0xff] %vm2720, %v2639
      %2769 = vst.msk [vmem:[%s145 + $0x180] sm:$0xff] %vm2720, %v2640
      %2770 = vst.msk [vmem:[%s145 + $0x188] sm:$0xff] %vm2720, %v2641
      %2771 = vst.msk [vmem:[%s145 + $0x190] sm:$0xff] %vm2720, %v2642
      %2772 = vst.msk [vmem:[%s145 + $0x198] sm:$0xff] %vm2720, %v2643
      %2773 = vst.msk [vmem:[%s145 + $0x1a0] sm:$0xff] %vm2720, %v2644
      %2774 = vst.msk [vmem:[%s145 + $0x1a8] sm:$0xff] %vm2720, %v2645
      %2775 = vst.msk [vmem:[%s145 + $0x1b0] sm:$0xff] %vm2720, %v2646
      %2776 = vst.msk [vmem:[%s145 + $0x1b8] sm:$0xff] %vm2720, %v2647
      %2777 = vst.msk [vmem:[%s145 + $0x1c0] sm:$0xff] %vm2720, %v2648
      %2778 = vst.msk [vmem:[%s145 + $0x1c8] sm:$0xff] %vm2720, %v2649
      %2779 = vst.msk [vmem:[%s145 + $0x1d0] sm:$0xff] %vm2720, %v2650
      %2780 = vst.msk [vmem:[%s145 + $0x1d8] sm:$0xff] %vm2720, %v2651
      %2781 = vst.msk [vmem:[%s145 + $0x1e0] sm:$0xff] %vm2720, %v2652
      %2782 = vst.msk [vmem:[%s145 + $0x1e8] sm:$0xff] %vm2720, %v2653
      %2783 = vst.msk [vmem:[%s145 + $0x1f0] sm:$0xff] %vm2720, %v2654
      %2784 = vst.msk [vmem:[%s145 + $0x1f8] sm:$0xff] %vm2720, %v2655
      %2785 = vst.msk [vmem:[%s145 + $0x200] sm:$0xff] %vm2720, %v2656
      %2786 = vst.msk [vmem:[%s145 + $0x208] sm:$0xff] %vm2720, %v2657
      %2787 = vst.msk [vmem:[%s145 + $0x210] sm:$0xff] %vm2720, %v2658
      %2788 = vst.msk [vmem:[%s145 + $0x218] sm:$0xff] %vm2720, %v2659
      %2789 = vst.msk [vmem:[%s145 + $0x220] sm:$0xff] %vm2720, %v2660
      %2790 = vst.msk [vmem:[%s145 + $0x228] sm:$0xff] %vm2720, %v2661
      %2791 = vst.msk [vmem:[%s145 + $0x230] sm:$0xff] %vm2720, %v2662
      %2792 = vst.msk [vmem:[%s145 + $0x238] sm:$0xff] %vm2720, %v2663
      %2793 = vst.msk [vmem:[%s145 + $0x240] sm:$0xff] %vm2720, %v2664
      %2794 = vst.msk [vmem:[%s145 + $0x248] sm:$0xff] %vm2720, %v2665
      %2795 = vst.msk [vmem:[%s145 + $0x250] sm:$0xff] %vm2720, %v2666
      %2796 = vst.msk [vmem:[%s145 + $0x258] sm:$0xff] %vm2720, %v2667
      %2797 = vst.msk [vmem:[%s145 + $0x260] sm:$0xff] %vm2720, %v2668
      %2798 = vst.msk [vmem:[%s145 + $0x268] sm:$0xff] %vm2720, %v2669
      %2799 = vst.msk [vmem:[%s145 + $0x270] sm:$0xff] %vm2720, %v2670
      %2800 = vst.msk [vmem:[%s145 + $0x278] sm:$0xff] %vm2720, %v2671
      %2801 = vst.msk [vmem:[%s145 + $0x280] sm:$0xff] %vm2720, %v2672
      %2802 = vst.msk [vmem:[%s145 + $0x288] sm:$0xff] %vm2720, %v2673
      %2803 = vst.msk [vmem:[%s145 + $0x290] sm:$0xff] %vm2720, %v2674
      %2804 = vst.msk [vmem:[%s145 + $0x298] sm:$0xff] %vm2720, %v2675
      %2805 = vst.msk [vmem:[%s145 + $0x2a0] sm:$0xff] %vm2720, %v2676
      %2806 = vst.msk [vmem:[%s145 + $0x2a8] sm:$0xff] %vm2720, %v2677
      %2807 = vst.msk [vmem:[%s145 + $0x2b0] sm:$0xff] %vm2720, %v2678
      %2808 = vst.msk [vmem:[%s145 + $0x2b8] sm:$0xff] %vm2720, %v2679
      %2809 = vst.msk [vmem:[%s145 + $0x2c0] sm:$0xff] %vm2720, %v2680
      %2810 = vst.msk [vmem:[%s145 + $0x2c8] sm:$0xff] %vm2720, %v2681
      %2811 = vst.msk [vmem:[%s145 + $0x2d0] sm:$0xff] %vm2720, %v2682
      %2812 = vst.msk [vmem:[%s145 + $0x2d8] sm:$0xff] %vm2720, %v2683
      %2813 = vst.msk [vmem:[%s145 + $0x2e0] sm:$0xff] %vm2720, %v2684
      %2814 = vst.msk [vmem:[%s145 + $0x2e8] sm:$0xff] %vm2720, %v2685
      %2815 = vst.msk [vmem:[%s145 + $0x2f0] sm:$0xff] %vm2720, %v2686
      %2816 = vst.msk [vmem:[%s145 + $0x2f8] sm:$0xff] %vm2720, %v2687
      %2817 = vst.msk [vmem:[%s145 + $0x300] sm:$0xff] %vm2720, %v2688
      %2818 = vst.msk [vmem:[%s145 + $0x308] sm:$0xff] %vm2720, %v2689
      %2819 = vst.msk [vmem:[%s145 + $0x310] sm:$0xff] %vm2720, %v2690
      %2820 = vst.msk [vmem:[%s145 + $0x318] sm:$0xff] %vm2720, %v2691
      %2821 = vst.msk [vmem:[%s145 + $0x320] sm:$0xff] %vm2720, %v2692
      %2822 = vst.msk [vmem:[%s145 + $0x328] sm:$0xff] %vm2720, %v2693
      %2823 = vst.msk [vmem:[%s145 + $0x330] sm:$0xff] %vm2720, %v2694
      %2824 = vst.msk [vmem:[%s145 + $0x338] sm:$0xff] %vm2720, %v2695
      %2825 = vst.msk [vmem:[%s145 + $0x340] sm:$0xff] %vm2720, %v2696
      %2826 = vst.msk [vmem:[%s145 + $0x348] sm:$0xff] %vm2720, %v2697
      %2827 = vst.msk [vmem:[%s145 + $0x350] sm:$0xff] %vm2720, %v2698
      %2828 = vst.msk [vmem:[%s145 + $0x358] sm:$0xff] %vm2720, %v2699
      %2829 = vst.msk [vmem:[%s145 + $0x360] sm:$0xff] %vm2720, %v2700
      %2830 = vst.msk [vmem:[%s145 + $0x368] sm:$0xff] %vm2720, %v2701
      %2831 = vst.msk [vmem:[%s145 + $0x370] sm:$0xff] %vm2720, %v2702
      %2832 = vst.msk [vmem:[%s145 + $0x378] sm:$0xff] %vm2720, %v2703
      %2833 = vst.msk [vmem:[%s145 + $0x380] sm:$0xff] %vm2720, %v2704
      %2834 = vst.msk [vmem:[%s145 + $0x388] sm:$0xff] %vm2720, %v2705
      %2835 = vst.msk [vmem:[%s145 + $0x390] sm:$0xff] %vm2720, %v2706
      %2836 = vst.msk [vmem:[%s145 + $0x398] sm:$0xff] %vm2720, %v2707
      %2837 = vst.msk [vmem:[%s145 + $0x3a0] sm:$0xff] %vm2720, %v2708
      %2838 = vst.msk [vmem:[%s145 + $0x3a8] sm:$0xff] %vm2720, %v2709
      %2839 = vst.msk [vmem:[%s145 + $0x3b0] sm:$0xff] %vm2720, %v2710
      %2840 = vst.msk [vmem:[%s145 + $0x3b8] sm:$0xff] %vm2720, %v2711
      %2841 = vst.msk [vmem:[%s145 + $0x3c0] sm:$0xff] %vm2720, %v2712
      %2842 = vst.msk [vmem:[%s145 + $0x3c8] sm:$0xff] %vm2720, %v2713
      %2843 = vst.msk [vmem:[%s145 + $0x3d0] sm:$0xff] %vm2720, %v2714
      %2844 = vst.msk [vmem:[%s145 + $0x3d8] sm:$0xff] %vm2720, %v2715
      %2845 = vst.msk [vmem:[%s145 + $0x3e0] sm:$0xff] %vm2720, %v2716
      %2846 = vst.msk [vmem:[%s145 + $0x3e8] sm:$0xff] %vm2720, %v2717
      %2847 = vst.msk [vmem:[%s145 + $0x3f0] sm:$0xff] %vm2720, %v2718
      %2848 = vst.msk [vmem:[%s145 + $0x3f8] sm:$0xff] %vm2720, %v2719
      %s2849 = smul.u32 128, %s13
      %p2850 = scmp.lt.s32.totalorder %s2849, 255
      %s2851 = scalar_select %p2850, %s2849, 255
      %s2852 = smul.addr %s2851, 8
      %s2853 = scalar_lea.vmem %s2, %s2852
      // Predicated region
      $region29: #{tpu_custom_call.1} parent=27 // pred_check
        %p2854 = pneg %p78
      $region30: #{tpu_custom_call.1} parent=27 // pred_check_branch
        %2856 = sbr.rel (%p2854) target = $region32
      $region31: #{tpu_custom_call.1} parent=27 // pred_region
        %s2857 = smul.u32 128, %s13
      $region32: #{tpu_custom_call.1} parent=27 // pred_fallthru
        _
    $region28: #{tpu_custom_call.1} parent=5 // pred_fallthru
      _
    %p2858 = scmp.le.s32.totalorder 2, %s8
    // Predicated region
    $region33: #{tpu_custom_call.1} parent=5 // pred_check
      %p2859 = pneg %p2858
    $region34: #{tpu_custom_call.1} parent=5 // pred_check_branch
      %2861 = sbr.rel (%p2859) target = $region36
    $region35: #{tpu_custom_call.1} parent=5 // pred_region
      %s2862 = ssub.s32 %s8, 2
      // Predicated region
      $region37: #{tpu_custom_call.1} parent=35 // pred_check
        %p2863 = pneg %p84
      $region38: #{tpu_custom_call.1} parent=35 // pred_check_branch
        %2865 = sbr.rel (%p2863) target = $region40
      $region39: #{tpu_custom_call.1} parent=35 // pred_region
        %s2866 = smul.u32 128, %s14
        %p2867 = scmp.lt.s32.totalorder %s2866, 255
        %s2868 = scalar_select %p2867, %s2866, 255
        %s2869 = smul.addr %s2868, 8
        %s2870 = scalar_lea.vmem %s2, %s2869
      $region40: #{tpu_custom_call.1} parent=35 // pred_fallthru
        _
    $region36: #{tpu_custom_call.1} parent=5 // pred_fallthru
      _
  $region6: #{tpu_custom_call.1} parent=0 // loop_footer
    %s12 = sadd.s32 1, %s8
  $region7: #{tpu_custom_call.1} parent=0 // loop_footer_branch
    %7 = sbr.rel target = $region3
  $region8: #{tpu_custom_call.1} parent=0 // loop_exit
    _

</llo_original>
